<compile_context>
chip_gen: v7x
topology: tpu7x:2x2x1
jax: 0.10.0
libtpu: 0.0.40
codegen_flags: <defaults>
</compile_context>

<pallas_src>
import functools
import math

import jax
import jax.numpy as jnp
from jax import lax
from jax.experimental import pallas as pl
from jax.experimental.pallas import tpu as pltpu


# ----------------------------------------------------------------------------
# Fused kernel: (linear_in @ GRU-input-proj) -> GRU recurrence -> linear_out
# ----------------------------------------------------------------------------
def _squeezed_gru_kernel(
    x_ref,        # (Bt, Tc, I)   input chunk, batch_first
    w_in_ref,     # (I, 3H)       blockdiag(W_lin_in) @ W_ih^T  (fused)
    b_gi_ref,     # (1, 3H)       b_ih with b_hh[:2H] folded into the r/z slices
    w_hh_ref,     # (H, 3H)       W_hh^T
    b_hn_ref,     # (1, H)        b_hh n-slice (stays inside r*(.))
    w_out_ref,    # (H, O)        blockdiag(W_lin_out)
    h0_ref,       # (Bt, 1, H)
    y_ref,        # (Bt, Tc, O)   output chunk
    hn_ref,       # (Bt, 1, H)    final hidden state (written on last chunk)
    gi_scr,       # VMEM (Bt*Tc, 3H) f32  batch-major rows (b*Tc + t)
    ys_scr,       # VMEM (Tc*Bt, H)  f32  time-major rows (t*Bt + b)
    yo_scr,       # VMEM (Tc*Bt, O)  f32  time-major linear_out result
    h_scr,        # VMEM (Bt, H)     f32  hidden-state carry across chunks
    *, Bt, Tc, H,
):
    c = pl.program_id(1)

    @pl.when(c == 0)
    def _():
        h_scr[...] = h0_ref[:, 0, :].astype(jnp.float32)

    # ---- chunk prologue: ONE matmul over the flattened (Bt*Tc, I) slab ------
    I = x_ref.shape[-1]
    x_flat = x_ref[...].reshape(Bt * Tc, I).astype(w_in_ref.dtype)
    gi_scr[...] = (
        jnp.dot(x_flat, w_in_ref[...], preferred_element_type=jnp.float32)
        + b_gi_ref[...]
    )

    # ---- serial GRU recurrence over the chunk (critical path) ---------------
    w_hh = w_hh_ref[...].astype(jnp.float32)
    b_hn = b_hn_ref[...].astype(jnp.float32)

    def step(t, h):
        # one strided gather: rows t, t+Tc, ... = this timestep's (Bt, 3H)
        gi = gi_scr[pl.ds(t, Bt, stride=Tc), :]
        gh = jnp.dot(h, w_hh, preferred_element_type=jnp.float32)     # (Bt, 3H)
        rz = jax.nn.sigmoid(gi[:, :2 * H] + gh[:, :2 * H])            # fused r,z
        r = rz[:, :H]
        z = rz[:, H:]
        n = jnp.tanh(gi[:, 2 * H:] + r * (gh[:, 2 * H:] + b_hn))
        h_new = (1.0 - z) * n + z * h
        # one contiguous (Bt, H) store into the time-major scratch
        ys_scr[pl.ds(t * Bt, Bt), :] = h_new
        return h_new

    unroll = True if Tc <= 32 else 8
    h_last = lax.fori_loop(0, Tc, step, h_scr[...], unroll=unroll)
    h_scr[...] = h_last

    @pl.when(c == pl.num_programs(1) - 1)
    def _():
        hn_ref[...] = h_last[:, None, :].astype(hn_ref.dtype)

    # ---- chunk epilogue: ONE linear_out matmul + per-b strided de-interleave
    yo_scr[...] = jnp.dot(
        ys_scr[...].astype(w_out_ref.dtype), w_out_ref[...],
        preferred_element_type=jnp.float32)
    for b in range(Bt):                    # once per chunk, not per timestep
        y_ref[b] = yo_scr[pl.ds(b, Tc, stride=Bt), :].astype(y_ref.dtype)


# ----------------------------------------------------------------------------
# Wrapper: weight fusion + pallas_call
# ----------------------------------------------------------------------------
def _block_diag(w):
    """(groups, ws, hg) -> (groups*ws, groups*hg) block-diagonal dense matrix."""
    g, ws, hg = w.shape
    eye = jnp.eye(g, dtype=w.dtype)
    return jnp.einsum("gih,gk->gikh", w, eye).reshape(g * ws, g * hg)


def squeezed_gru_s_forward(params, x, h0=None, *, t_chunk=None, b_chunk=None,
                           matmul_dtype=None):
    """x: (B, T, input_size) batch_first.  Returns (y (B,T,O), h (1,B,H)).

    t_chunk:      time-chunk length (auto-derived from VMEM budget if None).
    b_chunk:      batch rows per grid block; set B//2 on v7x to use both cores.
    matmul_dtype: e.g. jnp.bfloat16 to run the big prologue/epilogue GEMMs in
                  bf16 on v6e/v7x (recurrent gate math stays f32).
    """
    B, T, I = x.shape
    H = params["w_hh"].shape[1]
    go, _, og = params["w_lin_out"].shape
    O = go * og

    if h0 is None:
        h0 = jnp.zeros((B, 1, H), x.dtype)
    else:
        h0 = jnp.reshape(h0, (B, 1, H)).astype(x.dtype)

    Bt = B if b_chunk is None else int(b_chunk)
    assert B % Bt == 0, "b_chunk must divide B"
    nb = B // Bt

    # ---- per-generation VMEM budget ----------------------------------------
    try:
        vmem_cap = int(pltpu.get_tpu_info().vmem_capacity_bytes)
    except Exception:
        vmem_cap = 64 * 1024 * 1024        # conservative (v7x) fallback

    itemsize = jnp.dtype(x.dtype).itemsize
    mm_item = jnp.dtype(matmul_dtype).itemsize if matmul_dtype is not None else 4
    weight_bytes = ((I * 3 * H + H * O) * mm_item
                    + (H * 3 * H + 3 * H + H) * 4
                    + 2 * B * H * itemsize)

    def footprint(tc):
        blocks = 2 * Bt * tc * (I + O) * itemsize          # double-buffered tiles
        scratch = Bt * tc * (3 * H + H + O) * 4 + Bt * H * 4
        return blocks + scratch + 2 * weight_bytes

    if t_chunk is None:
        budget = max(vmem_cap // 2, 8 * 1024 * 1024)
        cands = [d for d in range(8, T + 1, 8) if T % d == 0]
        if not cands:
            cands = [T]
        t_chunk = cands[0]
        for d in cands:                                    # ascending; monotonic
            if footprint(d) <= budget:
                t_chunk = d
    Tc = int(t_chunk)
    assert T % Tc == 0, "t_chunk must divide T"
    assert Tc == T or Tc % 8 == 0, "t_chunk must be a multiple of 8 (or == T)"
    n_chunks = T // Tc

    # Clamp the scoped-VMEM limit safely below physical VMEM (v7x = 64 MiB).
    need = footprint(Tc)
    vmem_limit = int(min(int(0.9 * vmem_cap),
                         max(16 * 1024 * 1024, need + (8 << 20))))

    # ---- weight fusion (done in f32; optional bf16 cast afterwards) ---------
    w_in_comb = _block_diag(params["w_lin_in"]).astype(jnp.float32) @ (
        params["w_ih"].T.astype(jnp.float32))                         # (I, 3H)
    w_out_bd = _block_diag(params["w_lin_out"]).astype(jnp.float32)   # (H, O)
    w_hh_t = params["w_hh"].T.astype(jnp.float32)                     # (H, 3H)
    b_ih = params["b_ih"].astype(jnp.float32)
    b_hh = params["b_hh"].astype(jnp.float32)
    b_gi = b_ih.at[:2 * H].add(b_hh[:2 * H]).reshape(1, 3 * H)        # fold r/z
    b_hn = b_hh[2 * H:].reshape(1, H)                                 # n-gate bias
    if matmul_dtype is not None:
        w_in_comb = w_in_comb.astype(matmul_dtype)
        w_out_bd = w_out_bd.astype(matmul_dtype)

    kernel = functools.partial(_squeezed_gru_kernel, Bt=Bt, Tc=Tc, H=H)
    y, hn = pl.pallas_call(
        kernel,
        out_shape=(
            jax.ShapeDtypeStruct((B, T, O), x.dtype),
            jax.ShapeDtypeStruct((B, 1, H), x.dtype),
        ),
        grid_spec=pltpu.PrefetchScalarGridSpec(
            num_scalar_prefetch=0,
            grid=(nb, n_chunks),
            in_specs=[
                pl.BlockSpec((Bt, Tc, I), lambda b, c: (b, c, 0)),
                pl.BlockSpec((I, 3 * H), lambda b, c: (0, 0)),
                pl.BlockSpec((1, 3 * H), lambda b, c: (0, 0)),
                pl.BlockSpec((H, 3 * H), lambda b, c: (0, 0)),
                pl.BlockSpec((1, H), lambda b, c: (0, 0)),
                pl.BlockSpec((H, O), lambda b, c: (0, 0)),
                pl.BlockSpec((Bt, 1, H), lambda b, c: (b, 0, 0)),
            ],
            out_specs=(
                pl.BlockSpec((Bt, Tc, O), lambda b, c: (b, c, 0)),
                pl.BlockSpec((Bt, 1, H), lambda b, c: (b, 0, 0)),
            ),
            scratch_shapes=[
                pltpu.VMEM((Bt * Tc, 3 * H), jnp.float32),   # gi (batch-major)
                pltpu.VMEM((Tc * Bt, H), jnp.float32),       # ys (time-major)
                pltpu.VMEM((Tc * Bt, O), jnp.float32),       # linear_out result
                pltpu.VMEM((Bt, H), jnp.float32),            # hidden carry
            ],
        ),
        compiler_params=pltpu.CompilerParams(
            dimension_semantics=("parallel", "arbitrary"),
            vmem_limit_bytes=vmem_limit,
        ),
    )(x, w_in_comb, b_gi, w_hh_t, b_hn, w_out_bd, h0)

    # gru_skip is None and linear_act_layer is Identity in this configuration.
    return y, jnp.transpose(hn, (1, 0, 2))                # (B,T,O), (1,B,H)


# ----------------------------------------------------------------------------
# Parameters (matching the PyTorch module's shapes / init style)
# ----------------------------------------------------------------------------
def init_params(key, input_size, hidden_size, output_size, groups):
    k1, k2, k3, k4, k5, k6 = jax.random.split(key, 6)

    def kaiming_uniform(k, shape):
        fan_in = shape[1] * shape[2]
        bound = math.sqrt(3.0) * math.sqrt(2.0 / 6.0) / math.sqrt(fan_in)
        return jax.random.uniform(k, shape, jnp.float32, -bound, bound)

    def gru_uniform(k, shape):
        bound = 1.0 / math.sqrt(hidden_size)
        return jax.random.uniform(k, shape, jnp.float32, -bound, bound)

    return dict(
        w_lin_in=kaiming_uniform(
            k1, (groups, input_size // groups, hidden_size // groups)),
        w_lin_out=kaiming_uniform(
            k2, (groups, hidden_size // groups, output_size // groups)),
        w_ih=gru_uniform(k3, (3 * hidden_size, hidden_size)),
        w_hh=gru_uniform(k4, (3 * hidden_size, hidden_size)),
        b_ih=gru_uniform(k5, (3 * hidden_size,)),
        b_hh=gru_uniform(k6, (3 * hidden_size,)),
    )


# ----------------------------------------------------------------------------
# Pure-JAX reference (faithful un-fused module semantics)
# ----------------------------------------------------------------------------
def _ref_forward(params, x, h0):
    B, T, _ = x.shape
    H = params["w_hh"].shape[1]

    def glin(z, w):
        g, ws, hg = w.shape
        zg = z.reshape(B, T, g, ws)
        return jnp.einsum("btgi,gih->btgh", zg, w).reshape(B, T, g * hg)

    xh = glin(x, params["w_lin_in"])

    def step(h, x_t):
        gi = x_t @ params["w_ih"].T + params["b_ih"]
        gh = h @ params["w_hh"].T + params["b_hh"]
        r = jax.nn.sigmoid(gi[:, :H] + gh[:, :H])
        z = jax.nn.sigmoid(gi[:, H:2 * H] + gh[:, H:2 * H])
        n = jnp.tanh(gi[:, 2 * H:] + r * gh[:, 2 * H:])
        h_new = (1.0 - z) * n + z * h
        return h_new, h_new

    h_last, ys = lax.scan(step, h0, jnp.transpose(xh, (1, 0, 2)))
    y = jnp.transpose(ys, (1, 0, 2))
    return glin(y, params["w_lin_out"]), h_last[None]


if __name__ == "__main__":
    INPUT_SIZE, HIDDEN_SIZE, OUTPUT_SIZE, GROUPS = 64, 32, 32, 8
    B, T = 2, 16          # 2 time-chunks of 8 -> exercises the carried state

    key = jax.random.PRNGKey(0)
    kp, kx = jax.random.split(key)
    params = init_params(kp, INPUT_SIZE, HIDDEN_SIZE, OUTPUT_SIZE, GROUPS)
    x = jax.random.normal(kx, (B, T, INPUT_SIZE), jnp.float32)

    h0 = jnp.zeros((B, HIDDEN_SIZE), jnp.float32)
    y_ref, h_ref = _ref_forward(params, x, h0)

    # Explicit 2-chunk run (exercises the cross-chunk hidden-state carry).
    fwd = jax.jit(functools.partial(squeezed_gru_s_forward, t_chunk=8))
    y, h = fwd(params, x)
    jax.block_until_ready((y, h))
    assert y.shape == (B, T, OUTPUT_SIZE) and h.shape == (1, B, HIDDEN_SIZE)
    assert jnp.allclose(y, y_ref, atol=1e-4, rtol=1e-4), \
        float(jnp.max(jnp.abs(y - y_ref)))
    assert jnp.allclose(h, h_ref, atol=1e-4, rtol=1e-4), \
        float(jnp.max(jnp.abs(h - h_ref)))

    # Auto-derived t_chunk path (VMEM-budget based, single chunk here).
    y2, h2 = jax.jit(squeezed_gru_s_forward)(params, x)
    jax.block_until_ready((y2, h2))
    assert jnp.allclose(y2, y_ref, atol=1e-4, rtol=1e-4)
    assert jnp.allclose(h2, h_ref, atol=1e-4, rtol=1e-4)

    print("KERNEL_OK")
</pallas_src>

<mosaic_0001>
module attributes {stable_mosaic.version = 11 : i64} {
  func.func @_squeezed_gru_kernel(%arg0: i32, %arg1: i32, %arg2: memref<2x8x64xf32, #tpu.memory_space<vmem>>, %arg3: memref<64x96xf32, #tpu.memory_space<vmem>>, %arg4: memref<1x96xf32, #tpu.memory_space<vmem>>, %arg5: memref<32x96xf32, #tpu.memory_space<vmem>>, %arg6: memref<1x32xf32, #tpu.memory_space<vmem>>, %arg7: memref<32x32xf32, #tpu.memory_space<vmem>>, %arg8: memref<2x1x32xf32, #tpu.memory_space<vmem>>, %arg9: memref<2x8x32xf32, #tpu.memory_space<vmem>>, %arg10: memref<2x1x32xf32, #tpu.memory_space<vmem>>, %arg11: memref<16x96xf32, #tpu.memory_space<vmem>>, %arg12: memref<16x32xf32, #tpu.memory_space<vmem>>, %arg13: memref<16x32xf32, #tpu.memory_space<vmem>>, %arg14: memref<2x32xf32, #tpu.memory_space<vmem>>) attributes {dimension_semantics = [#tpu.dimension_semantics<parallel>, #tpu.dimension_semantics<arbitrary>], iteration_bounds = array<i64: 1, 2>, scalar_prefetch = 0 : i64, scratch_operands = 4 : i64, tpu.core_type = #tpu.core_type<tc>, window_params = [{transform_indices = @transform_0, window_bounds = array<i64: 2, 8, 64>}, {pipeline_mode = #tpu.pipeline_mode<synchronous>, transform_indices = @transform_1, window_bounds = array<i64: 64, 96>}, {pipeline_mode = #tpu.pipeline_mode<synchronous>, transform_indices = @transform_2, window_bounds = array<i64: 1, 96>}, {pipeline_mode = #tpu.pipeline_mode<synchronous>, transform_indices = @transform_3, window_bounds = array<i64: 32, 96>}, {pipeline_mode = #tpu.pipeline_mode<synchronous>, transform_indices = @transform_4, window_bounds = array<i64: 1, 32>}, {pipeline_mode = #tpu.pipeline_mode<synchronous>, transform_indices = @transform_5, window_bounds = array<i64: 32, 32>}, {transform_indices = @transform_6, window_bounds = array<i64: 2, 1, 32>}, {transform_indices = @transform_7, window_bounds = array<i64: 2, 8, 32>}, {transform_indices = @transform_8, window_bounds = array<i64: 2, 1, 32>}]} {
    %c0_i32 = arith.constant 0 : i32
    %0 = arith.cmpi eq, %arg1, %c0_i32 : i32
    %1 = arith.extui %0 : i1 to i32
    %c0_i32_0 = arith.constant 0 : i32
    %2 = arith.cmpi ne, %1, %c0_i32_0 : i32
    scf.if %2 {
      %c0_84 = arith.constant 0 : index
      %c0_85 = arith.constant 0 : index
      %c0_86 = arith.constant 0 : index
      %254 = vector.load %arg8[%c0_84, %c0_85, %c0_86] : memref<2x1x32xf32, #tpu.memory_space<vmem>>, vector<2x1x32xf32>
      %255 = vector.shape_cast %254 : vector<2x1x32xf32> to vector<2x32xf32>
      %c0_87 = arith.constant 0 : index
      %c0_88 = arith.constant 0 : index
      %256 = vector.load %arg14[%c0_87, %c0_88] : memref<2x32xf32, #tpu.memory_space<vmem>>, vector<2x32xf32>
      tpu.vector_store %arg14[%c0_87, %c0_88], %255 {strides = array<i32>} : memref<2x32xf32, #tpu.memory_space<vmem>>, vector<2x32xf32>,
    } else {
    }
    %c0 = arith.constant 0 : index
    %c0_1 = arith.constant 0 : index
    %c0_2 = arith.constant 0 : index
    %3 = vector.load %arg2[%c0, %c0_1, %c0_2] : memref<2x8x64xf32, #tpu.memory_space<vmem>>, vector<2x8x64xf32>
    %4 = vector.shape_cast %3 : vector<2x8x64xf32> to vector<16x64xf32>
    %c0_3 = arith.constant 0 : index
    %c0_4 = arith.constant 0 : index
    %5 = vector.load %arg3[%c0_3, %c0_4] : memref<64x96xf32, #tpu.memory_space<vmem>>, vector<64x96xf32>
    %cst = arith.constant dense<0.000000e+00> : vector<16x96xf32>
    %6 = tpu.matmul %4, %5, %cst {dimension_numbers = #tpu.dot_dimension_numbers<[1], [0], [0], [1], [0, 0, 1, 1], [], []>} : vector<16x64xf32>, vector<64x96xf32>, vector<16x96xf32> -> vector<16x96xf32>
    %c0_5 = arith.constant 0 : index
    %c0_6 = arith.constant 0 : index
    %7 = vector.load %arg4[%c0_5, %c0_6] : memref<1x96xf32, #tpu.memory_space<vmem>>, vector<1x96xf32>
    %8 = vector.broadcast %7 : vector<1x96xf32> to vector<16x96xf32>
    %9 = arith.addf %6, %8 : vector<16x96xf32>
    %c0_7 = arith.constant 0 : index
    %c0_8 = arith.constant 0 : index
    %10 = vector.load %arg11[%c0_7, %c0_8] : memref<16x96xf32, #tpu.memory_space<vmem>>, vector<16x96xf32>
    tpu.vector_store %arg11[%c0_7, %c0_8], %9 {strides = array<i32>} : memref<16x96xf32, #tpu.memory_space<vmem>>, vector<16x96xf32>,
    %c0_9 = arith.constant 0 : index
    %c0_10 = arith.constant 0 : index
    %11 = vector.load %arg5[%c0_9, %c0_10] : memref<32x96xf32, #tpu.memory_space<vmem>>, vector<32x96xf32>
    %c0_11 = arith.constant 0 : index
    %c0_12 = arith.constant 0 : index
    %12 = vector.load %arg6[%c0_11, %c0_12] : memref<1x32xf32, #tpu.memory_space<vmem>>, vector<1x32xf32>
    %c0_13 = arith.constant 0 : index
    %c0_14 = arith.constant 0 : index
    %13 = vector.load %arg14[%c0_13, %c0_14] : memref<2x32xf32, #tpu.memory_space<vmem>>, vector<2x32xf32>
    %c0_i32_15 = arith.constant 0 : i32
    %14 = arith.index_cast %c0_i32_15 : i32 to index
    %c0_16 = arith.constant 0 : index
    %15 = tpu.strided_load %arg11[%14, %c0_16] {strides = array<i32: 8, 1>} : memref<16x96xf32, #tpu.memory_space<vmem>>, vector<2x96xf32>
    %cst_17 = arith.constant dense<0.000000e+00> : vector<2x96xf32>
    %16 = tpu.matmul %13, %11, %cst_17 {dimension_numbers = #tpu.dot_dimension_numbers<[1], [0], [0], [1], [0, 0, 1, 1], [], []>} : vector<2x32xf32>, vector<32x96xf32>, vector<2x96xf32> -> vector<2x96xf32>
    %17 = vector.extract_strided_slice %15 {offsets = [0, 0], sizes = [2, 64], strides = [1, 1]} : vector<2x96xf32> to vector<2x64xf32>
    %18 = vector.extract_strided_slice %16 {offsets = [0, 0], sizes = [2, 64], strides = [1, 1]} : vector<2x96xf32> to vector<2x64xf32>
    %19 = arith.addf %17, %18 : vector<2x64xf32>
    %20 = arith.negf %19 : vector<2x64xf32>
    %21 = math.exp %20 : vector<2x64xf32>
    %cst_18 = arith.constant 1.000000e+00 : f32
    %22 = vector.broadcast %cst_18 : f32 to vector<2x64xf32>
    %23 = arith.addf %22, %21 : vector<2x64xf32>
    %24 = arith.divf %22, %23 : vector<2x64xf32>
    %25 = vector.extract_strided_slice %24 {offsets = [0, 0], sizes = [2, 32], strides = [1, 1]} : vector<2x64xf32> to vector<2x32xf32>
    %26 = vector.extract_strided_slice %24 {offsets = [0, 32], sizes = [2, 32], strides = [1, 1]} : vector<2x64xf32> to vector<2x32xf32>
    %27 = vector.extract_strided_slice %15 {offsets = [0, 64], sizes = [2, 32], strides = [1, 1]} : vector<2x96xf32> to vector<2x32xf32>
    %28 = vector.extract_strided_slice %16 {offsets = [0, 64], sizes = [2, 32], strides = [1, 1]} : vector<2x96xf32> to vector<2x32xf32>
    %29 = vector.broadcast %12 : vector<1x32xf32> to vector<2x32xf32>
    %30 = arith.addf %28, %29 : vector<2x32xf32>
    %31 = arith.mulf %25, %30 : vector<2x32xf32>
    %32 = arith.addf %27, %31 : vector<2x32xf32>
    %33 = math.tanh %32 : vector<2x32xf32>
    %cst_19 = arith.constant 1.000000e+00 : f32
    %34 = vector.broadcast %cst_19 : f32 to vector<2x32xf32>
    %35 = arith.subf %34, %26 : vector<2x32xf32>
    %36 = arith.mulf %35, %33 : vector<2x32xf32>
    %37 = arith.mulf %26, %13 : vector<2x32xf32>
    %38 = arith.addf %36, %37 : vector<2x32xf32>
    %c2_i32 = arith.constant 2 : i32
    %39 = arith.muli %c0_i32_15, %c2_i32 : i32
    %40 = arith.index_cast %39 : i32 to index
    %c0_20 = arith.constant 0 : index
    %41 = vector.load %arg12[%40, %c0_20] : memref<16x32xf32, #tpu.memory_space<vmem>>, vector<2x32xf32>
    tpu.vector_store %arg12[%40, %c0_20], %38 {strides = array<i32>} : memref<16x32xf32, #tpu.memory_space<vmem>>, vector<2x32xf32>,
    %c1_i32 = arith.constant 1 : i32
    %42 = arith.index_cast %c1_i32 : i32 to index
    %c0_21 = arith.constant 0 : index
    %43 = tpu.strided_load %arg11[%42, %c0_21] {strides = array<i32: 8, 1>} : memref<16x96xf32, #tpu.memory_space<vmem>>, vector<2x96xf32>
    %cst_22 = arith.constant dense<0.000000e+00> : vector<2x96xf32>
    %44 = tpu.matmul %38, %11, %cst_22 {dimension_numbers = #tpu.dot_dimension_numbers<[1], [0], [0], [1], [0, 0, 1, 1], [], []>} : vector<2x32xf32>, vector<32x96xf32>, vector<2x96xf32> -> vector<2x96xf32>
    %45 = vector.extract_strided_slice %43 {offsets = [0, 0], sizes = [2, 64], strides = [1, 1]} : vector<2x96xf32> to vector<2x64xf32>
    %46 = vector.extract_strided_slice %44 {offsets = [0, 0], sizes = [2, 64], strides = [1, 1]} : vector<2x96xf32> to vector<2x64xf32>
    %47 = arith.addf %45, %46 : vector<2x64xf32>
    %48 = arith.negf %47 : vector<2x64xf32>
    %49 = math.exp %48 : vector<2x64xf32>
    %cst_23 = arith.constant 1.000000e+00 : f32
    %50 = vector.broadcast %cst_23 : f32 to vector<2x64xf32>
    %51 = arith.addf %50, %49 : vector<2x64xf32>
    %52 = arith.divf %50, %51 : vector<2x64xf32>
    %53 = vector.extract_strided_slice %52 {offsets = [0, 0], sizes = [2, 32], strides = [1, 1]} : vector<2x64xf32> to vector<2x32xf32>
    %54 = vector.extract_strided_slice %52 {offsets = [0, 32], sizes = [2, 32], strides = [1, 1]} : vector<2x64xf32> to vector<2x32xf32>
    %55 = vector.extract_strided_slice %43 {offsets = [0, 64], sizes = [2, 32], strides = [1, 1]} : vector<2x96xf32> to vector<2x32xf32>
    %56 = vector.extract_strided_slice %44 {offsets = [0, 64], sizes = [2, 32], strides = [1, 1]} : vector<2x96xf32> to vector<2x32xf32>
    %57 = vector.broadcast %12 : vector<1x32xf32> to vector<2x32xf32>
    %58 = arith.addf %56, %57 : vector<2x32xf32>
    %59 = arith.mulf %53, %58 : vector<2x32xf32>
    %60 = arith.addf %55, %59 : vector<2x32xf32>
    %61 = math.tanh %60 : vector<2x32xf32>
    %cst_24 = arith.constant 1.000000e+00 : f32
    %62 = vector.broadcast %cst_24 : f32 to vector<2x32xf32>
    %63 = arith.subf %62, %54 : vector<2x32xf32>
    %64 = arith.mulf %63, %61 : vector<2x32xf32>
    %65 = arith.mulf %54, %38 : vector<2x32xf32>
    %66 = arith.addf %64, %65 : vector<2x32xf32>
    %c2_i32_25 = arith.constant 2 : i32
    %67 = arith.muli %c1_i32, %c2_i32_25 : i32
    %68 = arith.index_cast %67 : i32 to index
    %c0_26 = arith.constant 0 : index
    %69 = vector.load %arg12[%68, %c0_26] : memref<16x32xf32, #tpu.memory_space<vmem>>, vector<2x32xf32>
    tpu.vector_store %arg12[%68, %c0_26], %66 {strides = array<i32>} : memref<16x32xf32, #tpu.memory_space<vmem>>, vector<2x32xf32>,
    %c2_i32_27 = arith.constant 2 : i32
    %70 = arith.index_cast %c2_i32_27 : i32 to index
    %c0_28 = arith.constant 0 : index
    %71 = tpu.strided_load %arg11[%70, %c0_28] {strides = array<i32: 8, 1>} : memref<16x96xf32, #tpu.memory_space<vmem>>, vector<2x96xf32>
    %cst_29 = arith.constant dense<0.000000e+00> : vector<2x96xf32>
    %72 = tpu.matmul %66, %11, %cst_29 {dimension_numbers = #tpu.dot_dimension_numbers<[1], [0], [0], [1], [0, 0, 1, 1], [], []>} : vector<2x32xf32>, vector<32x96xf32>, vector<2x96xf32> -> vector<2x96xf32>
    %73 = vector.extract_strided_slice %71 {offsets = [0, 0], sizes = [2, 64], strides = [1, 1]} : vector<2x96xf32> to vector<2x64xf32>
    %74 = vector.extract_strided_slice %72 {offsets = [0, 0], sizes = [2, 64], strides = [1, 1]} : vector<2x96xf32> to vector<2x64xf32>
    %75 = arith.addf %73, %74 : vector<2x64xf32>
    %76 = arith.negf %75 : vector<2x64xf32>
    %77 = math.exp %76 : vector<2x64xf32>
    %cst_30 = arith.constant 1.000000e+00 : f32
    %78 = vector.broadcast %cst_30 : f32 to vector<2x64xf32>
    %79 = arith.addf %78, %77 : vector<2x64xf32>
    %80 = arith.divf %78, %79 : vector<2x64xf32>
    %81 = vector.extract_strided_slice %80 {offsets = [0, 0], sizes = [2, 32], strides = [1, 1]} : vector<2x64xf32> to vector<2x32xf32>
    %82 = vector.extract_strided_slice %80 {offsets = [0, 32], sizes = [2, 32], strides = [1, 1]} : vector<2x64xf32> to vector<2x32xf32>
    %83 = vector.extract_strided_slice %71 {offsets = [0, 64], sizes = [2, 32], strides = [1, 1]} : vector<2x96xf32> to vector<2x32xf32>
    %84 = vector.extract_strided_slice %72 {offsets = [0, 64], sizes = [2, 32], strides = [1, 1]} : vector<2x96xf32> to vector<2x32xf32>
    %85 = vector.broadcast %12 : vector<1x32xf32> to vector<2x32xf32>
    %86 = arith.addf %84, %85 : vector<2x32xf32>
    %87 = arith.mulf %81, %86 : vector<2x32xf32>
    %88 = arith.addf %83, %87 : vector<2x32xf32>
    %89 = math.tanh %88 : vector<2x32xf32>
    %cst_31 = arith.constant 1.000000e+00 : f32
    %90 = vector.broadcast %cst_31 : f32 to vector<2x32xf32>
    %91 = arith.subf %90, %82 : vector<2x32xf32>
    %92 = arith.mulf %91, %89 : vector<2x32xf32>
    %93 = arith.mulf %82, %66 : vector<2x32xf32>
    %94 = arith.addf %92, %93 : vector<2x32xf32>
    %c2_i32_32 = arith.constant 2 : i32
    %95 = arith.muli %c2_i32_27, %c2_i32_32 : i32
    %96 = arith.index_cast %95 : i32 to index
    %c0_33 = arith.constant 0 : index
    %97 = vector.load %arg12[%96, %c0_33] : memref<16x32xf32, #tpu.memory_space<vmem>>, vector<2x32xf32>
    tpu.vector_store %arg12[%96, %c0_33], %94 {strides = array<i32>} : memref<16x32xf32, #tpu.memory_space<vmem>>, vector<2x32xf32>,
    %c3_i32 = arith.constant 3 : i32
    %98 = arith.index_cast %c3_i32 : i32 to index
    %c0_34 = arith.constant 0 : index
    %99 = tpu.strided_load %arg11[%98, %c0_34] {strides = array<i32: 8, 1>} : memref<16x96xf32, #tpu.memory_space<vmem>>, vector<2x96xf32>
    %cst_35 = arith.constant dense<0.000000e+00> : vector<2x96xf32>
    %100 = tpu.matmul %94, %11, %cst_35 {dimension_numbers = #tpu.dot_dimension_numbers<[1], [0], [0], [1], [0, 0, 1, 1], [], []>} : vector<2x32xf32>, vector<32x96xf32>, vector<2x96xf32> -> vector<2x96xf32>
    %101 = vector.extract_strided_slice %99 {offsets = [0, 0], sizes = [2, 64], strides = [1, 1]} : vector<2x96xf32> to vector<2x64xf32>
    %102 = vector.extract_strided_slice %100 {offsets = [0, 0], sizes = [2, 64], strides = [1, 1]} : vector<2x96xf32> to vector<2x64xf32>
    %103 = arith.addf %101, %102 : vector<2x64xf32>
    %104 = arith.negf %103 : vector<2x64xf32>
    %105 = math.exp %104 : vector<2x64xf32>
    %cst_36 = arith.constant 1.000000e+00 : f32
    %106 = vector.broadcast %cst_36 : f32 to vector<2x64xf32>
    %107 = arith.addf %106, %105 : vector<2x64xf32>
    %108 = arith.divf %106, %107 : vector<2x64xf32>
    %109 = vector.extract_strided_slice %108 {offsets = [0, 0], sizes = [2, 32], strides = [1, 1]} : vector<2x64xf32> to vector<2x32xf32>
    %110 = vector.extract_strided_slice %108 {offsets = [0, 32], sizes = [2, 32], strides = [1, 1]} : vector<2x64xf32> to vector<2x32xf32>
    %111 = vector.extract_strided_slice %99 {offsets = [0, 64], sizes = [2, 32], strides = [1, 1]} : vector<2x96xf32> to vector<2x32xf32>
    %112 = vector.extract_strided_slice %100 {offsets = [0, 64], sizes = [2, 32], strides = [1, 1]} : vector<2x96xf32> to vector<2x32xf32>
    %113 = vector.broadcast %12 : vector<1x32xf32> to vector<2x32xf32>
    %114 = arith.addf %112, %113 : vector<2x32xf32>
    %115 = arith.mulf %109, %114 : vector<2x32xf32>
    %116 = arith.addf %111, %115 : vector<2x32xf32>
    %117 = math.tanh %116 : vector<2x32xf32>
    %cst_37 = arith.constant 1.000000e+00 : f32
    %118 = vector.broadcast %cst_37 : f32 to vector<2x32xf32>
    %119 = arith.subf %118, %110 : vector<2x32xf32>
    %120 = arith.mulf %119, %117 : vector<2x32xf32>
    %121 = arith.mulf %110, %94 : vector<2x32xf32>
    %122 = arith.addf %120, %121 : vector<2x32xf32>
    %c2_i32_38 = arith.constant 2 : i32
    %123 = arith.muli %c3_i32, %c2_i32_38 : i32
    %124 = arith.index_cast %123 : i32 to index
    %c0_39 = arith.constant 0 : index
    %125 = vector.load %arg12[%124, %c0_39] : memref<16x32xf32, #tpu.memory_space<vmem>>, vector<2x32xf32>
    tpu.vector_store %arg12[%124, %c0_39], %122 {strides = array<i32>} : memref<16x32xf32, #tpu.memory_space<vmem>>, vector<2x32xf32>,
    %c4_i32 = arith.constant 4 : i32
    %126 = arith.index_cast %c4_i32 : i32 to index
    %c0_40 = arith.constant 0 : index
    %127 = tpu.strided_load %arg11[%126, %c0_40] {strides = array<i32: 8, 1>} : memref<16x96xf32, #tpu.memory_space<vmem>>, vector<2x96xf32>
    %cst_41 = arith.constant dense<0.000000e+00> : vector<2x96xf32>
    %128 = tpu.matmul %122, %11, %cst_41 {dimension_numbers = #tpu.dot_dimension_numbers<[1], [0], [0], [1], [0, 0, 1, 1], [], []>} : vector<2x32xf32>, vector<32x96xf32>, vector<2x96xf32> -> vector<2x96xf32>
    %129 = vector.extract_strided_slice %127 {offsets = [0, 0], sizes = [2, 64], strides = [1, 1]} : vector<2x96xf32> to vector<2x64xf32>
    %130 = vector.extract_strided_slice %128 {offsets = [0, 0], sizes = [2, 64], strides = [1, 1]} : vector<2x96xf32> to vector<2x64xf32>
    %131 = arith.addf %129, %130 : vector<2x64xf32>
    %132 = arith.negf %131 : vector<2x64xf32>
    %133 = math.exp %132 : vector<2x64xf32>
    %cst_42 = arith.constant 1.000000e+00 : f32
    %134 = vector.broadcast %cst_42 : f32 to vector<2x64xf32>
    %135 = arith.addf %134, %133 : vector<2x64xf32>
    %136 = arith.divf %134, %135 : vector<2x64xf32>
    %137 = vector.extract_strided_slice %136 {offsets = [0, 0], sizes = [2, 32], strides = [1, 1]} : vector<2x64xf32> to vector<2x32xf32>
    %138 = vector.extract_strided_slice %136 {offsets = [0, 32], sizes = [2, 32], strides = [1, 1]} : vector<2x64xf32> to vector<2x32xf32>
    %139 = vector.extract_strided_slice %127 {offsets = [0, 64], sizes = [2, 32], strides = [1, 1]} : vector<2x96xf32> to vector<2x32xf32>
    %140 = vector.extract_strided_slice %128 {offsets = [0, 64], sizes = [2, 32], strides = [1, 1]} : vector<2x96xf32> to vector<2x32xf32>
    %141 = vector.broadcast %12 : vector<1x32xf32> to vector<2x32xf32>
    %142 = arith.addf %140, %141 : vector<2x32xf32>
    %143 = arith.mulf %137, %142 : vector<2x32xf32>
    %144 = arith.addf %139, %143 : vector<2x32xf32>
    %145 = math.tanh %144 : vector<2x32xf32>
    %cst_43 = arith.constant 1.000000e+00 : f32
    %146 = vector.broadcast %cst_43 : f32 to vector<2x32xf32>
    %147 = arith.subf %146, %138 : vector<2x32xf32>
    %148 = arith.mulf %147, %145 : vector<2x32xf32>
    %149 = arith.mulf %138, %122 : vector<2x32xf32>
    %150 = arith.addf %148, %149 : vector<2x32xf32>
    %c2_i32_44 = arith.constant 2 : i32
    %151 = arith.muli %c4_i32, %c2_i32_44 : i32
    %152 = arith.index_cast %151 : i32 to index
    %c0_45 = arith.constant 0 : index
    %153 = vector.load %arg12[%152, %c0_45] : memref<16x32xf32, #tpu.memory_space<vmem>>, vector<2x32xf32>
    tpu.vector_store %arg12[%152, %c0_45], %150 {strides = array<i32>} : memref<16x32xf32, #tpu.memory_space<vmem>>, vector<2x32xf32>,
    %c5_i32 = arith.constant 5 : i32
    %154 = arith.index_cast %c5_i32 : i32 to index
    %c0_46 = arith.constant 0 : index
    %155 = tpu.strided_load %arg11[%154, %c0_46] {strides = array<i32: 8, 1>} : memref<16x96xf32, #tpu.memory_space<vmem>>, vector<2x96xf32>
    %cst_47 = arith.constant dense<0.000000e+00> : vector<2x96xf32>
    %156 = tpu.matmul %150, %11, %cst_47 {dimension_numbers = #tpu.dot_dimension_numbers<[1], [0], [0], [1], [0, 0, 1, 1], [], []>} : vector<2x32xf32>, vector<32x96xf32>, vector<2x96xf32> -> vector<2x96xf32>
    %157 = vector.extract_strided_slice %155 {offsets = [0, 0], sizes = [2, 64], strides = [1, 1]} : vector<2x96xf32> to vector<2x64xf32>
    %158 = vector.extract_strided_slice %156 {offsets = [0, 0], sizes = [2, 64], strides = [1, 1]} : vector<2x96xf32> to vector<2x64xf32>
    %159 = arith.addf %157, %158 : vector<2x64xf32>
    %160 = arith.negf %159 : vector<2x64xf32>
    %161 = math.exp %160 : vector<2x64xf32>
    %cst_48 = arith.constant 1.000000e+00 : f32
    %162 = vector.broadcast %cst_48 : f32 to vector<2x64xf32>
    %163 = arith.addf %162, %161 : vector<2x64xf32>
    %164 = arith.divf %162, %163 : vector<2x64xf32>
    %165 = vector.extract_strided_slice %164 {offsets = [0, 0], sizes = [2, 32], strides = [1, 1]} : vector<2x64xf32> to vector<2x32xf32>
    %166 = vector.extract_strided_slice %164 {offsets = [0, 32], sizes = [2, 32], strides = [1, 1]} : vector<2x64xf32> to vector<2x32xf32>
    %167 = vector.extract_strided_slice %155 {offsets = [0, 64], sizes = [2, 32], strides = [1, 1]} : vector<2x96xf32> to vector<2x32xf32>
    %168 = vector.extract_strided_slice %156 {offsets = [0, 64], sizes = [2, 32], strides = [1, 1]} : vector<2x96xf32> to vector<2x32xf32>
    %169 = vector.broadcast %12 : vector<1x32xf32> to vector<2x32xf32>
    %170 = arith.addf %168, %169 : vector<2x32xf32>
    %171 = arith.mulf %165, %170 : vector<2x32xf32>
    %172 = arith.addf %167, %171 : vector<2x32xf32>
    %173 = math.tanh %172 : vector<2x32xf32>
    %cst_49 = arith.constant 1.000000e+00 : f32
    %174 = vector.broadcast %cst_49 : f32 to vector<2x32xf32>
    %175 = arith.subf %174, %166 : vector<2x32xf32>
    %176 = arith.mulf %175, %173 : vector<2x32xf32>
    %177 = arith.mulf %166, %150 : vector<2x32xf32>
    %178 = arith.addf %176, %177 : vector<2x32xf32>
    %c2_i32_50 = arith.constant 2 : i32
    %179 = arith.muli %c5_i32, %c2_i32_50 : i32
    %180 = arith.index_cast %179 : i32 to index
    %c0_51 = arith.constant 0 : index
    %181 = vector.load %arg12[%180, %c0_51] : memref<16x32xf32, #tpu.memory_space<vmem>>, vector<2x32xf32>
    tpu.vector_store %arg12[%180, %c0_51], %178 {strides = array<i32>} : memref<16x32xf32, #tpu.memory_space<vmem>>, vector<2x32xf32>,
    %c6_i32 = arith.constant 6 : i32
    %182 = arith.index_cast %c6_i32 : i32 to index
    %c0_52 = arith.constant 0 : index
    %183 = tpu.strided_load %arg11[%182, %c0_52] {strides = array<i32: 8, 1>} : memref<16x96xf32, #tpu.memory_space<vmem>>, vector<2x96xf32>
    %cst_53 = arith.constant dense<0.000000e+00> : vector<2x96xf32>
    %184 = tpu.matmul %178, %11, %cst_53 {dimension_numbers = #tpu.dot_dimension_numbers<[1], [0], [0], [1], [0, 0, 1, 1], [], []>} : vector<2x32xf32>, vector<32x96xf32>, vector<2x96xf32> -> vector<2x96xf32>
    %185 = vector.extract_strided_slice %183 {offsets = [0, 0], sizes = [2, 64], strides = [1, 1]} : vector<2x96xf32> to vector<2x64xf32>
    %186 = vector.extract_strided_slice %184 {offsets = [0, 0], sizes = [2, 64], strides = [1, 1]} : vector<2x96xf32> to vector<2x64xf32>
    %187 = arith.addf %185, %186 : vector<2x64xf32>
    %188 = arith.negf %187 : vector<2x64xf32>
    %189 = math.exp %188 : vector<2x64xf32>
    %cst_54 = arith.constant 1.000000e+00 : f32
    %190 = vector.broadcast %cst_54 : f32 to vector<2x64xf32>
    %191 = arith.addf %190, %189 : vector<2x64xf32>
    %192 = arith.divf %190, %191 : vector<2x64xf32>
    %193 = vector.extract_strided_slice %192 {offsets = [0, 0], sizes = [2, 32], strides = [1, 1]} : vector<2x64xf32> to vector<2x32xf32>
    %194 = vector.extract_strided_slice %192 {offsets = [0, 32], sizes = [2, 32], strides = [1, 1]} : vector<2x64xf32> to vector<2x32xf32>
    %195 = vector.extract_strided_slice %183 {offsets = [0, 64], sizes = [2, 32], strides = [1, 1]} : vector<2x96xf32> to vector<2x32xf32>
    %196 = vector.extract_strided_slice %184 {offsets = [0, 64], sizes = [2, 32], strides = [1, 1]} : vector<2x96xf32> to vector<2x32xf32>
    %197 = vector.broadcast %12 : vector<1x32xf32> to vector<2x32xf32>
    %198 = arith.addf %196, %197 : vector<2x32xf32>
    %199 = arith.mulf %193, %198 : vector<2x32xf32>
    %200 = arith.addf %195, %199 : vector<2x32xf32>
    %201 = math.tanh %200 : vector<2x32xf32>
    %cst_55 = arith.constant 1.000000e+00 : f32
    %202 = vector.broadcast %cst_55 : f32 to vector<2x32xf32>
    %203 = arith.subf %202, %194 : vector<2x32xf32>
    %204 = arith.mulf %203, %201 : vector<2x32xf32>
    %205 = arith.mulf %194, %178 : vector<2x32xf32>
    %206 = arith.addf %204, %205 : vector<2x32xf32>
    %c2_i32_56 = arith.constant 2 : i32
    %207 = arith.muli %c6_i32, %c2_i32_56 : i32
    %208 = arith.index_cast %207 : i32 to index
    %c0_57 = arith.constant 0 : index
    %209 = vector.load %arg12[%208, %c0_57] : memref<16x32xf32, #tpu.memory_space<vmem>>, vector<2x32xf32>
    tpu.vector_store %arg12[%208, %c0_57], %206 {strides = array<i32>} : memref<16x32xf32, #tpu.memory_space<vmem>>, vector<2x32xf32>,
    %c7_i32 = arith.constant 7 : i32
    %210 = arith.index_cast %c7_i32 : i32 to index
    %c0_58 = arith.constant 0 : index
    %211 = tpu.strided_load %arg11[%210, %c0_58] {strides = array<i32: 8, 1>} : memref<16x96xf32, #tpu.memory_space<vmem>>, vector<2x96xf32>
    %cst_59 = arith.constant dense<0.000000e+00> : vector<2x96xf32>
    %212 = tpu.matmul %206, %11, %cst_59 {dimension_numbers = #tpu.dot_dimension_numbers<[1], [0], [0], [1], [0, 0, 1, 1], [], []>} : vector<2x32xf32>, vector<32x96xf32>, vector<2x96xf32> -> vector<2x96xf32>
    %213 = vector.extract_strided_slice %211 {offsets = [0, 0], sizes = [2, 64], strides = [1, 1]} : vector<2x96xf32> to vector<2x64xf32>
    %214 = vector.extract_strided_slice %212 {offsets = [0, 0], sizes = [2, 64], strides = [1, 1]} : vector<2x96xf32> to vector<2x64xf32>
    %215 = arith.addf %213, %214 : vector<2x64xf32>
    %216 = arith.negf %215 : vector<2x64xf32>
    %217 = math.exp %216 : vector<2x64xf32>
    %cst_60 = arith.constant 1.000000e+00 : f32
    %218 = vector.broadcast %cst_60 : f32 to vector<2x64xf32>
    %219 = arith.addf %218, %217 : vector<2x64xf32>
    %220 = arith.divf %218, %219 : vector<2x64xf32>
    %221 = vector.extract_strided_slice %220 {offsets = [0, 0], sizes = [2, 32], strides = [1, 1]} : vector<2x64xf32> to vector<2x32xf32>
    %222 = vector.extract_strided_slice %220 {offsets = [0, 32], sizes = [2, 32], strides = [1, 1]} : vector<2x64xf32> to vector<2x32xf32>
    %223 = vector.extract_strided_slice %211 {offsets = [0, 64], sizes = [2, 32], strides = [1, 1]} : vector<2x96xf32> to vector<2x32xf32>
    %224 = vector.extract_strided_slice %212 {offsets = [0, 64], sizes = [2, 32], strides = [1, 1]} : vector<2x96xf32> to vector<2x32xf32>
    %225 = vector.broadcast %12 : vector<1x32xf32> to vector<2x32xf32>
    %226 = arith.addf %224, %225 : vector<2x32xf32>
    %227 = arith.mulf %221, %226 : vector<2x32xf32>
    %228 = arith.addf %223, %227 : vector<2x32xf32>
    %229 = math.tanh %228 : vector<2x32xf32>
    %cst_61 = arith.constant 1.000000e+00 : f32
    %230 = vector.broadcast %cst_61 : f32 to vector<2x32xf32>
    %231 = arith.subf %230, %222 : vector<2x32xf32>
    %232 = arith.mulf %231, %229 : vector<2x32xf32>
    %233 = arith.mulf %222, %206 : vector<2x32xf32>
    %234 = arith.addf %232, %233 : vector<2x32xf32>
    %c2_i32_62 = arith.constant 2 : i32
    %235 = arith.muli %c7_i32, %c2_i32_62 : i32
    %236 = arith.index_cast %235 : i32 to index
    %c0_63 = arith.constant 0 : index
    %237 = vector.load %arg12[%236, %c0_63] : memref<16x32xf32, #tpu.memory_space<vmem>>, vector<2x32xf32>
    tpu.vector_store %arg12[%236, %c0_63], %234 {strides = array<i32>} : memref<16x32xf32, #tpu.memory_space<vmem>>, vector<2x32xf32>,
    %c8_i32 = arith.constant 8 : i32
    %c0_64 = arith.constant 0 : index
    %c0_65 = arith.constant 0 : index
    %238 = vector.load %arg14[%c0_64, %c0_65] : memref<2x32xf32, #tpu.memory_space<vmem>>, vector<2x32xf32>
    tpu.vector_store %arg14[%c0_64, %c0_65], %234 {strides = array<i32>} : memref<2x32xf32, #tpu.memory_space<vmem>>, vector<2x32xf32>,
    %c1_i32_66 = arith.constant 1 : i32
    %239 = arith.cmpi eq, %arg1, %c1_i32_66 : i32
    %240 = arith.extui %239 : i1 to i32
    %c0_i32_67 = arith.constant 0 : i32
    %241 = arith.cmpi ne, %240, %c0_i32_67 : i32
    scf.if %241 {
      %254 = vector.shape_cast %234 : vector<2x32xf32> to vector<2x1x32xf32>
      %c0_84 = arith.constant 0 : index
      %c0_85 = arith.constant 0 : index
      %c0_86 = arith.constant 0 : index
      %255 = vector.load %arg10[%c0_84, %c0_85, %c0_86] : memref<2x1x32xf32, #tpu.memory_space<vmem>>, vector<2x1x32xf32>
      tpu.vector_store %arg10[%c0_84, %c0_85, %c0_86], %254 {strides = array<i32>} : memref<2x1x32xf32, #tpu.memory_space<vmem>>, vector<2x1x32xf32>,
    } else {
    }
    %c0_68 = arith.constant 0 : index
    %c0_69 = arith.constant 0 : index
    %242 = vector.load %arg12[%c0_68, %c0_69] : memref<16x32xf32, #tpu.memory_space<vmem>>, vector<16x32xf32>
    %c0_70 = arith.constant 0 : index
    %c0_71 = arith.constant 0 : index
    %243 = vector.load %arg7[%c0_70, %c0_71] : memref<32x32xf32, #tpu.memory_space<vmem>>, vector<32x32xf32>
    %cst_72 = arith.constant dense<0.000000e+00> : vector<16x32xf32>
    %244 = tpu.matmul %242, %243, %cst_72 {dimension_numbers = #tpu.dot_dimension_numbers<[1], [0], [0], [1], [0, 0, 1, 1], [], []>} : vector<16x32xf32>, vector<32x32xf32>, vector<16x32xf32> -> vector<16x32xf32>
    %c0_73 = arith.constant 0 : index
    %c0_74 = arith.constant 0 : index
    %245 = vector.load %arg13[%c0_73, %c0_74] : memref<16x32xf32, #tpu.memory_space<vmem>>, vector<16x32xf32>
    tpu.vector_store %arg13[%c0_73, %c0_74], %244 {strides = array<i32>} : memref<16x32xf32, #tpu.memory_space<vmem>>, vector<16x32xf32>,
    %c0_75 = arith.constant 0 : index
    %c0_76 = arith.constant 0 : index
    %246 = tpu.strided_load %arg13[%c0_75, %c0_76] {strides = array<i32: 2, 1>} : memref<16x32xf32, #tpu.memory_space<vmem>>, vector<8x32xf32>
    %c0_77 = arith.constant 0 : index
    %c0_78 = arith.constant 0 : index
    %c0_79 = arith.constant 0 : index
    %247 = vector.load %arg9[%c0_77, %c0_78, %c0_79] : memref<2x8x32xf32, #tpu.memory_space<vmem>>, vector<1x8x32xf32>
    %248 = vector.shape_cast %247 : vector<1x8x32xf32> to vector<8x32xf32>
    %249 = vector.shape_cast %246 : vector<8x32xf32> to vector<1x8x32xf32>
    tpu.vector_store %arg9[%c0_77, %c0_78, %c0_79], %249 {strides = array<i32>} : memref<2x8x32xf32, #tpu.memory_space<vmem>>, vector<1x8x32xf32>,
    %c1 = arith.constant 1 : index
    %c0_80 = arith.constant 0 : index
    %250 = tpu.strided_load %arg13[%c1, %c0_80] {strides = array<i32: 2, 1>} : memref<16x32xf32, #tpu.memory_space<vmem>>, vector<8x32xf32>
    %c1_81 = arith.constant 1 : index
    %c0_82 = arith.constant 0 : index
    %c0_83 = arith.constant 0 : index
    %251 = vector.load %arg9[%c1_81, %c0_82, %c0_83] : memref<2x8x32xf32, #tpu.memory_space<vmem>>, vector<1x8x32xf32>
    %252 = vector.shape_cast %251 : vector<1x8x32xf32> to vector<8x32xf32>
    %253 = vector.shape_cast %250 : vector<8x32xf32> to vector<1x8x32xf32>
    tpu.vector_store %arg9[%c1_81, %c0_82, %c0_83], %253 {strides = array<i32>} : memref<2x8x32xf32, #tpu.memory_space<vmem>>, vector<1x8x32xf32>,
    return
  }
  func.func @transform_0(%arg0: i32, %arg1: i32) -> (i32, i32, i32) {
    %c0_i32 = arith.constant 0 : i32
    %c0_i32_0 = arith.constant 0 : i32
    return %arg0, %arg1, %c0_i32 : i32, i32, i32
  }
  func.func @transform_1(%arg0: i32, %arg1: i32) -> (i32, i32) {
    %c0_i32 = arith.constant 0 : i32
    %c0_i32_0 = arith.constant 0 : i32
    %c0_i32_1 = arith.constant 0 : i32
    return %c0_i32, %c0_i32_0 : i32, i32
  }
  func.func @transform_2(%arg0: i32, %arg1: i32) -> (i32, i32) {
    %c0_i32 = arith.constant 0 : i32
    %c0_i32_0 = arith.constant 0 : i32
    %c0_i32_1 = arith.constant 0 : i32
    return %c0_i32, %c0_i32_0 : i32, i32
  }
  func.func @transform_3(%arg0: i32, %arg1: i32) -> (i32, i32) {
    %c0_i32 = arith.constant 0 : i32
    %c0_i32_0 = arith.constant 0 : i32
    %c0_i32_1 = arith.constant 0 : i32
    return %c0_i32, %c0_i32_0 : i32, i32
  }
  func.func @transform_4(%arg0: i32, %arg1: i32) -> (i32, i32) {
    %c0_i32 = arith.constant 0 : i32
    %c0_i32_0 = arith.constant 0 : i32
    %c0_i32_1 = arith.constant 0 : i32
    return %c0_i32, %c0_i32_0 : i32, i32
  }
  func.func @transform_5(%arg0: i32, %arg1: i32) -> (i32, i32) {
    %c0_i32 = arith.constant 0 : i32
    %c0_i32_0 = arith.constant 0 : i32
    %c0_i32_1 = arith.constant 0 : i32
    return %c0_i32, %c0_i32_0 : i32, i32
  }
  func.func @transform_6(%arg0: i32, %arg1: i32) -> (i32, i32, i32) {
    %c0_i32 = arith.constant 0 : i32
    %c0_i32_0 = arith.constant 0 : i32
    %c0_i32_1 = arith.constant 0 : i32
    return %arg0, %c0_i32, %c0_i32_0 : i32, i32, i32
  }
  func.func @transform_7(%arg0: i32, %arg1: i32) -> (i32, i32, i32) {
    %c0_i32 = arith.constant 0 : i32
    %c0_i32_0 = arith.constant 0 : i32
    return %arg0, %arg1, %c0_i32 : i32, i32, i32
  }
  func.func @transform_8(%arg0: i32, %arg1: i32) -> (i32, i32, i32) {
    %c0_i32 = arith.constant 0 : i32
    %c0_i32_0 = arith.constant 0 : i32
    %c0_i32_1 = arith.constant 0 : i32
    return %arg0, %c0_i32, %c0_i32_0 : i32, i32, i32
  }
}

</mosaic_0001>

<llo_original>
// kernel: squeezed_gru_s_forward.1
$region0: #{squeezed_gru_s_forward.1}
  #allocation0 [shape = 'u32[]', space=smem, size = 0x4, offset = 0x4, fixed_abs, tag = 'smem constant byte address 0x4 - core index']
  #allocation1 [shape = 'u32[144,128]{1,0:T(1,128)}', space=vmem, size = 0x12000, scoped, tag = 'internal scratch']
  #allocation2 [shape = 'f32[16,96]{1,0:T(8,128)}', space=vmem, size = 0x2000, scoped, tag = 'scratch operand']
  #allocation3 [shape = 'f32[16,32]{1,0:T(8,128)}', space=vmem, size = 0x2000, scoped, tag = 'scratch operand']
  #allocation4 [shape = 'f32[16,32]{1,0:T(8,128)}', space=vmem, size = 0x2000, scoped, tag = 'scratch operand']
  #allocation5 [shape = 'f32[2,32]{1,0:T(2,128)}', space=vmem, size = 0x400, scoped, tag = 'scratch operand']
  %s0 = inlined_call_operand.vmem [shape: f32[2,16,64], index: 0, kind: input, shape index: {}]
  %s1 = inlined_call_operand.vmem [shape: f32[64,96], index: 1, kind: input, shape index: {}]
  %s2 = inlined_call_operand.vmem [shape: f32[1,96], index: 2, kind: input, shape index: {}]
  %s3 = inlined_call_operand.vmem [shape: f32[32,96], index: 3, kind: input, shape index: {}]
  %s4 = inlined_call_operand.vmem [shape: f32[1,32], index: 4, kind: input, shape index: {}]
  %s5 = inlined_call_operand.vmem [shape: f32[32,32], index: 5, kind: input, shape index: {}]
  %s6 = inlined_call_operand.vmem [shape: f32[2,1,32], index: 6, kind: input, shape index: {}]
  %s7 = inlined_call_operand.hbm [shape: f32[2,16,32], index: 7, kind: output, shape index: {0}]
  %s8 = inlined_call_operand.hbm [shape: f32[2,1,32], index: 8, kind: output, shape index: {1}]
  %9 = xla_tuple %s7, %s8
  %s10 = sld [smem:[#allocation0]]
  $region115: #{squeezed_gru_s_forward.1} parent=0
    _
  %s12 = ssub.s32 1, %s10
  %s13 = scalar_select 0, %s12, %s10
  $region1: #{squeezed_gru_s_forward.1} parent=0
    #allocation6 [shape = 'u8[16384]{0}', space=vmem, size = 0x4000, scoped, tag = 'input window, operand 0']
    #allocation7 [shape = 'u8[16384]{0}', space=vmem, size = 0x4000, scoped, tag = 'output window, operand 0']
    #allocation8 [shape = 's32[2]{0}', space=sflag, size = 0x8, scoped, tag = 'scoped memory for squeezed_gru_s_forward.1']
    #allocation9 [shape = 'u8[1024]{0}', space=vmem, size = 0x400, scoped, tag = 'output window, operand 1, single buffered']
    #allocation10 [shape = 's32[1]{0}', space=sflag, size = 0x4, scoped, tag = 'scoped memory for squeezed_gru_s_forward.1']
    %14 = vsyncpa [#allocation8], 0
    %s15 = scalar_lea.sflag [#allocation8], 1
    %16 = vsyncpa %s15, 0
    %17 = vsyncpa [#allocation10], 0
    loop: start=0, step=1, limit=4
    $region2: #{squeezed_gru_s_forward.1} parent=1 // loop_pre_header
      _
    $region3: #{squeezed_gru_s_forward.1} parent=1 // loop_header
      %s19 = sphi 0, %s23
      %p20 = scmp.ge.s32.totalorder %s19, 4
      %s26 = sphi 0, %s38
      %s27 = sphi 0, %s34
      %s28 = sphi 0, %s26
      %s29 = sphi 0, %s27
      %s30 = sphi 0, %s28
      %s31 = sphi 0, %s29
      %s43 = sphi 0, %s45
      %s46 = sphi 0, %s43
      %s47 = sphi 0, %s46
      %s63 = sphi 0, %s47
      %s67 = sphi 0, %s67
      %s69 = sphi 0, %s67
      %s70 = sphi 0, %s69
      %s84 = sphi 0, %s70
      %s88 = sphi 0, %s88
      %s90 = sphi 0, %s88
      %s91 = sphi 0, %s90
      %s105 = sphi 0, %s91
      %s109 = sphi 0, %s109
      %s111 = sphi 0, %s109
      %s112 = sphi 0, %s111
      %s126 = sphi 0, %s112
      %s130 = sphi 0, %s130
      %s132 = sphi 0, %s130
      %s133 = sphi 0, %s132
      %s147 = sphi 0, %s133
      %s151 = sphi 0, %s151
      %s153 = sphi 0, %s151
      %s154 = sphi 0, %s153
      %s168 = sphi 0, %s154
      %s174 = sphi 0, %s176
      %s177 = sphi 0, %s174
      %s178 = sphi 0, %s177
      %s194 = sphi 0, %s178
      %s202 = sphi 0, %s204
      %s205 = sphi 0, %s202
      %s206 = sphi 0, %s205
      %s222 = sphi 0, %s206
      %s228 = sphi 0, %s230
      %s231 = sphi 0, %s228
      %s232 = sphi 0, %s231
      %s248 = sphi 0, %s232
    $region4: #{squeezed_gru_s_forward.1} parent=1 // loop_header_branch
      %22 = sbr.rel (%p20) target = $region8
    $region5: #{squeezed_gru_s_forward.1} parent=1 // loop_body
      %s24 = ssub.s32 %s19, 1
      %s25 = ssub.s32 %s19, 2
      %s32 = sadd.s32 1, %s27
      %p33 = scmp.ge.s32.totalorder %s32, 2
      %s34 = scalar_select %p33, 0, %s32
      %s35 = sadd.s32 1, %s26
      %s36 = scalar_select %p33, %s35, %s26
      %p37 = scmp.ge.s32.totalorder %s36, 1
      %s38 = scalar_select %p37, 0, %s36
      %s39 = ssub.s32 %s26, %s38
      %s40 = ssub.s32 %s27, %s34
      %s41 = sor.u32 %s39, %s40
      %p42 = scmp.eq.s32.totalorder %s41, 0
      %s44 = sadd.s32 %s43, 1
      %s45 = scalar_select %p42, %s43, %s44
      %p48 = pneg %p42
      %p49 = scmp.eq.s32.totalorder %s19, 1
      %p50 = por %p48, %p49
      %p51 = scmp.ne.s32.totalorder %s43, %s46
      %p52 = scmp.eq.s32.totalorder %s19, 0
      %p53 = por %p51, %p52
      %p54 = scmp.ne.s32.totalorder %s43, %s46
      %p55 = scmp.eq.s32.totalorder %s24, 1
      %p56 = por %p54, %p55
      %p57 = scmp.ne.s32.totalorder %s46, %s47
      %p58 = scmp.eq.s32.totalorder %s24, 0
      %p59 = por %p57, %p58
      %p60 = scmp.ne.s32.totalorder %s46, %s47
      %p61 = scmp.eq.s32.totalorder %s25, 1
      %p62 = por %p60, %p61
      %p64 = scmp.ne.s32.totalorder %s47, %s63
      %p65 = scmp.eq.s32.totalorder %s25, 0
      %p66 = por %p64, %p65
      %s68 = sadd.s32 %s67, 1
      %p71 = scmp.eq.s32.totalorder %s19, 1
      %p72 = scmp.ne.s32.totalorder %s67, %s69
      %p73 = scmp.eq.s32.totalorder %s19, 0
      %p74 = por %p72, %p73
      %p75 = scmp.ne.s32.totalorder %s67, %s69
      %p76 = scmp.eq.s32.totalorder %s24, 1
      %p77 = por %p75, %p76
      %p78 = scmp.ne.s32.totalorder %s69, %s70
      %p79 = scmp.eq.s32.totalorder %s24, 0
      %p80 = por %p78, %p79
      %p81 = scmp.ne.s32.totalorder %s69, %s70
      %p82 = scmp.eq.s32.totalorder %s25, 1
      %p83 = por %p81, %p82
      %p85 = scmp.ne.s32.totalorder %s70, %s84
      %p86 = scmp.eq.s32.totalorder %s25, 0
      %p87 = por %p85, %p86
      %s89 = sadd.s32 %s88, 1
      %p92 = scmp.eq.s32.totalorder %s19, 1
      %p93 = scmp.ne.s32.totalorder %s88, %s90
      %p94 = scmp.eq.s32.totalorder %s19, 0
      %p95 = por %p93, %p94
      %p96 = scmp.ne.s32.totalorder %s88, %s90
      %p97 = scmp.eq.s32.totalorder %s24, 1
      %p98 = por %p96, %p97
      %p99 = scmp.ne.s32.totalorder %s90, %s91
      %p100 = scmp.eq.s32.totalorder %s24, 0
      %p101 = por %p99, %p100
      %p102 = scmp.ne.s32.totalorder %s90, %s91
      %p103 = scmp.eq.s32.totalorder %s25, 1
      %p104 = por %p102, %p103
      %p106 = scmp.ne.s32.totalorder %s91, %s105
      %p107 = scmp.eq.s32.totalorder %s25, 0
      %p108 = por %p106, %p107
      %s110 = sadd.s32 %s109, 1
      %p113 = scmp.eq.s32.totalorder %s19, 1
      %p114 = scmp.ne.s32.totalorder %s109, %s111
      %p115 = scmp.eq.s32.totalorder %s19, 0
      %p116 = por %p114, %p115
      %p117 = scmp.ne.s32.totalorder %s109, %s111
      %p118 = scmp.eq.s32.totalorder %s24, 1
      %p119 = por %p117, %p118
      %p120 = scmp.ne.s32.totalorder %s111, %s112
      %p121 = scmp.eq.s32.totalorder %s24, 0
      %p122 = por %p120, %p121
      %p123 = scmp.ne.s32.totalorder %s111, %s112
      %p124 = scmp.eq.s32.totalorder %s25, 1
      %p125 = por %p123, %p124
      %p127 = scmp.ne.s32.totalorder %s112, %s126
      %p128 = scmp.eq.s32.totalorder %s25, 0
      %p129 = por %p127, %p128
      %s131 = sadd.s32 %s130, 1
      %p134 = scmp.eq.s32.totalorder %s19, 1
      %p135 = scmp.ne.s32.totalorder %s130, %s132
      %p136 = scmp.eq.s32.totalorder %s19, 0
      %p137 = por %p135, %p136
      %p138 = scmp.ne.s32.totalorder %s130, %s132
      %p139 = scmp.eq.s32.totalorder %s24, 1
      %p140 = por %p138, %p139
      %p141 = scmp.ne.s32.totalorder %s132, %s133
      %p142 = scmp.eq.s32.totalorder %s24, 0
      %p143 = por %p141, %p142
      %p144 = scmp.ne.s32.totalorder %s132, %s133
      %p145 = scmp.eq.s32.totalorder %s25, 1
      %p146 = por %p144, %p145
      %p148 = scmp.ne.s32.totalorder %s133, %s147
      %p149 = scmp.eq.s32.totalorder %s25, 0
      %p150 = por %p148, %p149
      %s152 = sadd.s32 %s151, 1
      %p155 = scmp.eq.s32.totalorder %s19, 1
      %p156 = scmp.ne.s32.totalorder %s151, %s153
      %p157 = scmp.eq.s32.totalorder %s19, 0
      %p158 = por %p156, %p157
      %p159 = scmp.ne.s32.totalorder %s151, %s153
      %p160 = scmp.eq.s32.totalorder %s24, 1
      %p161 = por %p159, %p160
      %p162 = scmp.ne.s32.totalorder %s153, %s154
      %p163 = scmp.eq.s32.totalorder %s24, 0
      %p164 = por %p162, %p163
      %p165 = scmp.ne.s32.totalorder %s153, %s154
      %p166 = scmp.eq.s32.totalorder %s25, 1
      %p167 = por %p165, %p166
      %p169 = scmp.ne.s32.totalorder %s154, %s168
      %p170 = scmp.eq.s32.totalorder %s25, 0
      %p171 = por %p169, %p170
      %s172 = ssub.s32 %s26, %s38
      %p173 = scmp.eq.s32.totalorder %s172, 0
      %s175 = sadd.s32 %s174, 1
      %s176 = scalar_select %p173, %s174, %s175
      %p179 = pneg %p173
      %p180 = scmp.eq.s32.totalorder %s19, 1
      %p181 = por %p179, %p180
      %p182 = scmp.ne.s32.totalorder %s174, %s177
      %p183 = scmp.eq.s32.totalorder %s19, 0
      %p184 = por %p182, %p183
      %p185 = scmp.ne.s32.totalorder %s174, %s177
      %p186 = scmp.eq.s32.totalorder %s24, 1
      %p187 = por %p185, %p186
      %p188 = scmp.ne.s32.totalorder %s177, %s178
      %p189 = scmp.eq.s32.totalorder %s24, 0
      %p190 = por %p188, %p189
      %p191 = scmp.ne.s32.totalorder %s177, %s178
      %p192 = scmp.eq.s32.totalorder %s25, 1
      %p193 = por %p191, %p192
      %p195 = scmp.ne.s32.totalorder %s178, %s194
      %p196 = scmp.eq.s32.totalorder %s25, 0
      %p197 = por %p195, %p196
      %s198 = ssub.s32 %s26, %s38
      %s199 = ssub.s32 %s27, %s34
      %s200 = sor.u32 %s198, %s199
      %p201 = scmp.eq.s32.totalorder %s200, 0
      %s203 = sadd.s32 %s202, 1
      %s204 = scalar_select %p201, %s202, %s203
      %p207 = pneg %p201
      %p208 = scmp.eq.s32.totalorder %s19, 1
      %p209 = por %p207, %p208
      %p210 = scmp.ne.s32.totalorder %s202, %s205
      %p211 = scmp.eq.s32.totalorder %s19, 0
      %p212 = por %p210, %p211
      %p213 = scmp.ne.s32.totalorder %s202, %s205
      %p214 = scmp.eq.s32.totalorder %s24, 1
      %p215 = por %p213, %p214
      %p216 = scmp.ne.s32.totalorder %s205, %s206
      %p217 = scmp.eq.s32.totalorder %s24, 0
      %p218 = por %p216, %p217
      %p219 = scmp.ne.s32.totalorder %s205, %s206
      %p220 = scmp.eq.s32.totalorder %s25, 1
      %p221 = por %p219, %p220
      %p223 = scmp.ne.s32.totalorder %s206, %s222
      %p224 = scmp.eq.s32.totalorder %s25, 0
      %p225 = por %p223, %p224
      %s226 = ssub.s32 %s26, %s38
      %p227 = scmp.eq.s32.totalorder %s226, 0
      %s229 = sadd.s32 %s228, 1
      %s230 = scalar_select %p227, %s228, %s229
      %p233 = pneg %p227
      %p234 = scmp.eq.s32.totalorder %s19, 1
      %p235 = por %p233, %p234
      %p236 = scmp.ne.s32.totalorder %s228, %s231
      %p237 = scmp.eq.s32.totalorder %s19, 0
      %p238 = por %p236, %p237
      %p239 = scmp.ne.s32.totalorder %s228, %s231
      %p240 = scmp.eq.s32.totalorder %s24, 1
      %p241 = por %p239, %p240
      %p242 = scmp.ne.s32.totalorder %s231, %s232
      %p243 = scmp.eq.s32.totalorder %s24, 0
      %p244 = por %p242, %p243
      %p245 = scmp.ne.s32.totalorder %s231, %s232
      %p246 = scmp.eq.s32.totalorder %s25, 1
      %p247 = por %p245, %p246
      %p249 = scmp.ne.s32.totalorder %s232, %s248
      %p250 = scmp.eq.s32.totalorder %s25, 0
      %p251 = por %p249, %p250
      %p252 = scmp.le.s32.totalorder 1, %s19
      %p253 = scmp.lt.s32.totalorder %s19, 3
      %p254 = pnand %p252, %p253
      %p255 = pneg %p254
      // Predicated region
      $region9: #{squeezed_gru_s_forward.1} parent=5 // pred_check
        _
      $region10: #{squeezed_gru_s_forward.1} parent=5 // pred_check_branch
        %257 = sbr.rel (%p254) target = $region12
      $region11: #{squeezed_gru_s_forward.1} parent=5 // pred_region
        %s258 = ssub.s32 %s19, 1
        // Predicated region
        $region13: #{squeezed_gru_s_forward.1} parent=11 // pred_check
          %p259 = pneg %p80
        $region14: #{squeezed_gru_s_forward.1} parent=11 // pred_check_branch
          %261 = sbr.rel (%p259) target = $region16
        $region15: #{squeezed_gru_s_forward.1} parent=11 // pred_region
          _
        $region16: #{squeezed_gru_s_forward.1} parent=11 // pred_fallthru
          _
        // Predicated region
        $region17: #{squeezed_gru_s_forward.1} parent=11 // pred_check
          %p262 = pneg %p101
        $region18: #{squeezed_gru_s_forward.1} parent=11 // pred_check_branch
          %264 = sbr.rel (%p262) target = $region20
        $region19: #{squeezed_gru_s_forward.1} parent=11 // pred_region
          _
        $region20: #{squeezed_gru_s_forward.1} parent=11 // pred_fallthru
          _
        // Predicated region
        $region21: #{squeezed_gru_s_forward.1} parent=11 // pred_check
          %p265 = pneg %p122
        $region22: #{squeezed_gru_s_forward.1} parent=11 // pred_check_branch
          %267 = sbr.rel (%p265) target = $region24
        $region23: #{squeezed_gru_s_forward.1} parent=11 // pred_region
          _
        $region24: #{squeezed_gru_s_forward.1} parent=11 // pred_fallthru
          _
        // Predicated region
        $region25: #{squeezed_gru_s_forward.1} parent=11 // pred_check
          %p268 = pneg %p143
        $region26: #{squeezed_gru_s_forward.1} parent=11 // pred_check_branch
          %270 = sbr.rel (%p268) target = $region28
        $region27: #{squeezed_gru_s_forward.1} parent=11 // pred_region
          _
        $region28: #{squeezed_gru_s_forward.1} parent=11 // pred_fallthru
          _
        // Predicated region
        $region29: #{squeezed_gru_s_forward.1} parent=11 // pred_check
          %p271 = pneg %p164
        $region30: #{squeezed_gru_s_forward.1} parent=11 // pred_check_branch
          %273 = sbr.rel (%p271) target = $region32
        $region31: #{squeezed_gru_s_forward.1} parent=11 // pred_region
          _
        $region32: #{squeezed_gru_s_forward.1} parent=11 // pred_fallthru
          _
        // Predicated region
        $region33: #{squeezed_gru_s_forward.1} parent=11 // pred_check
          %p274 = pneg %p190
        $region34: #{squeezed_gru_s_forward.1} parent=11 // pred_check_branch
          %276 = sbr.rel (%p274) target = $region36
        $region35: #{squeezed_gru_s_forward.1} parent=11 // pred_region
          %s277 = smul.u32 2, %s28
          %p278 = scmp.lt.s32.totalorder %s277, 1
          %s279 = scalar_select %p278, %s277, 1
          %s280 = scalar_lea.vmem %s6, %s279
          %s281 = smul.u32 2, %s28
        $region36: #{squeezed_gru_s_forward.1} parent=11 // pred_fallthru
          _
      $region12: #{squeezed_gru_s_forward.1} parent=5 // pred_fallthru
        _
      %p282 = scmp.lt.s32.totalorder %s19, 2
      // Predicated region
      $region37: #{squeezed_gru_s_forward.1} parent=5 // pred_check
        %p283 = pneg %p282
      $region38: #{squeezed_gru_s_forward.1} parent=5 // pred_check_branch
        %285 = sbr.rel (%p283) target = $region40
      $region39: #{squeezed_gru_s_forward.1} parent=5 // pred_region
        // Predicated region
        $region41: #{squeezed_gru_s_forward.1} parent=39 // pred_check
          %p286 = pneg %p53
        $region42: #{squeezed_gru_s_forward.1} parent=39 // pred_check_branch
          %288 = sbr.rel (%p286) target = $region44
        $region43: #{squeezed_gru_s_forward.1} parent=39 // pred_region
          %s289 = sand.u32 %s43, 1
          %s290 = sand.u32 %s43, 1
          %s291 = smul.addr %s290, 16
          %s292 = scalar_lea.vmem [#allocation6], %s291
          %s293 = smul.u32 2, %s26
          %s294 = smul.addr %s293, 2
          %s295 = sadd.s32 %s27, %s294
          %s296 = smul.addr %s295, 8
          %s297 = scalar_lea.vmem %s0, %s296
          // Predicated region
          $region45: #{squeezed_gru_s_forward.1} parent=43 // pred_check
            _
          $region46: #{squeezed_gru_s_forward.1} parent=43 // pred_check_branch
            %299 = sbr.rel (0) target = $region48
          $region47: #{squeezed_gru_s_forward.1} parent=43 // pred_region
            // Predicated region
            $region49: #{squeezed_gru_s_forward.1} parent=47 // pred_check
              _
            $region50: #{squeezed_gru_s_forward.1} parent=47 // pred_check_branch
              %301 = sbr.rel (0) target = $region52
            $region51: #{squeezed_gru_s_forward.1} parent=47 // pred_region
              // Predicated region
              $region64: #{squeezed_gru_s_forward.1} parent=51 // pred_check
                _
              $region65: #{squeezed_gru_s_forward.1} parent=51 // pred_check_branch
                %318 = sbr.rel (0) target = $region67
              $region66: #{squeezed_gru_s_forward.1} parent=51 // pred_region
                loop: start=0, step=1, limit=1
                $region68: #{squeezed_gru_s_forward.1} parent=66 // loop_pre_header
                  _
                $region69: #{squeezed_gru_s_forward.1} parent=66 // loop_header
                  %s320 = sphi 0, %s324
                  %p321 = scmp.ge.s32.totalorder %s320, 1
                  %s325 = sphi %s297, %s297
                  %s326 = sphi %s292, %s292
                $region70: #{squeezed_gru_s_forward.1} parent=66 // loop_header_branch
                  %323 = sbr.rel (%p321) target = $region74
                $region71: #{squeezed_gru_s_forward.1} parent=66 // loop_body
                  %v327 = vld [vmem:[%s325] sm:$0xff]
                  %328 = vst [vmem:[%s326] sm:$0xff] %v327
                  %v329 = vld [vmem:[%s325 + $0x10] sm:$0xff]
                  %330 = vst [vmem:[%s326 + $0x8] sm:$0xff] %v329
                $region72: #{squeezed_gru_s_forward.1} parent=66 // loop_footer
                  %s324 = sadd.s32 1, %s320
                $region73: #{squeezed_gru_s_forward.1} parent=66 // loop_footer_branch
                  %319 = sbr.rel target = $region69
                $region74: #{squeezed_gru_s_forward.1} parent=66 // loop_exit
                  _
              $region67: #{squeezed_gru_s_forward.1} parent=51 // pred_fallthru
                _
              // Predicated region
              $region75: #{squeezed_gru_s_forward.1} parent=51 // pred_check
                _
              $region76: #{squeezed_gru_s_forward.1} parent=51 // pred_check_branch
                %332 = sbr.rel target = $region78
              $region77: #{squeezed_gru_s_forward.1} parent=51 // pred_region
                _
              $region78: #{squeezed_gru_s_forward.1} parent=51 // pred_fallthru
                _
            $region52: #{squeezed_gru_s_forward.1} parent=47 // pred_fallthru
              _
            // Predicated region
            $region53: #{squeezed_gru_s_forward.1} parent=47 // pred_check
              _
            $region54: #{squeezed_gru_s_forward.1} parent=47 // pred_check_branch
              %303 = sbr.rel target = $region56
            $region55: #{squeezed_gru_s_forward.1} parent=47 // pred_region
              loop: start=0, step=1, limit=1
              $region57: #{squeezed_gru_s_forward.1} parent=55 // loop_pre_header
                _
              $region58: #{squeezed_gru_s_forward.1} parent=55 // loop_header
                %s306 = sphi 0, %s310
                %p307 = scmp.ge.s32.totalorder %s306, 1
                %s311 = sphi %s297, %s297
                %s312 = sphi %s292, %s292
              $region59: #{squeezed_gru_s_forward.1} parent=55 // loop_header_branch
                %309 = sbr.rel (%p307) target = $region63
              $region60: #{squeezed_gru_s_forward.1} parent=55 // loop_body
                %v313 = vld [vmem:[%s311] sm:$0xff]
                %314 = vst [vmem:[%s312] sm:$0xff] %v313
                %v315 = vld [vmem:[%s311 + $0x10] sm:$0xff]
                %316 = vst [vmem:[%s312 + $0x8] sm:$0xff] %v315
              $region61: #{squeezed_gru_s_forward.1} parent=55 // loop_footer
                %s310 = sadd.s32 1, %s306
              $region62: #{squeezed_gru_s_forward.1} parent=55 // loop_footer_branch
                %305 = sbr.rel target = $region58
              $region63: #{squeezed_gru_s_forward.1} parent=55 // loop_exit
                _
            $region56: #{squeezed_gru_s_forward.1} parent=47 // pred_fallthru
              _
          $region48: #{squeezed_gru_s_forward.1} parent=43 // pred_fallthru
            _
          %333 = vnop
        $region44: #{squeezed_gru_s_forward.1} parent=39 // pred_fallthru
          _
      $region40: #{squeezed_gru_s_forward.1} parent=5 // pred_fallthru
        _
      %p334 = scmp.le.s32.totalorder 1, %s19
      %p335 = scmp.lt.s32.totalorder %s19, 3
      %p336 = pnand %p334, %p335
      %p337 = pneg %p336
      // Predicated region
      $region79: #{squeezed_gru_s_forward.1} parent=5 // pred_check
        _
      $region80: #{squeezed_gru_s_forward.1} parent=5 // pred_check_branch
        %339 = sbr.rel (%p336) target = $region82
      $region81: #{squeezed_gru_s_forward.1} parent=5 // pred_region
        %s340 = ssub.s32 %s19, 1
        %s341 = sand.u32 %s46, 1
        %s342 = sand.u32 %s46, 1
        %s343 = smul.addr %s342, 16
        %s344 = scalar_lea.vmem [#allocation6], %s343
        // Predicated region
        $region83: #{squeezed_gru_s_forward.1} parent=81 // pred_check
          %p345 = pneg %p59
        $region84: #{squeezed_gru_s_forward.1} parent=81 // pred_check_branch
          %347 = sbr.rel (%p345) target = $region86
        $region85: #{squeezed_gru_s_forward.1} parent=81 // pred_region
          _
        $region86: #{squeezed_gru_s_forward.1} parent=81 // pred_fallthru
          _
        %s348 = sand.u32 %s46, 1
        %s349 = sand.u32 %s46, 1
        %s350 = smul.addr %s349, 16
        %s351 = scalar_lea.vmem [#allocation6], %s350
        %p352 = pneg %p59
        %p353 = pneg %p56
        %p354 = pneg %p80
        %p355 = pneg %p77
        %p356 = pneg %p101
        %p357 = pneg %p98
        %p358 = pneg %p122
        %p359 = pneg %p119
        %p360 = pneg %p143
        %p361 = pneg %p140
        %p362 = pneg %p164
        %p363 = pneg %p161
        %s364 = smul.u32 2, %s28
        %p365 = scmp.lt.s32.totalorder %s364, 1
        %s366 = scalar_select %p365, %s364, 1
        %s367 = scalar_lea.vmem %s6, %s366
        %p368 = pneg %p190
        %p369 = pneg %p187
        %p370 = pneg %p218
        %p371 = pneg %p215
        %s372 = sand.u32 %s205, 1
        %s373 = scalar_lea.sflag [#allocation8], %s372
        %s374 = sand.u32 %s205, 1
        %s375 = smul.addr %s374, 16
        %s376 = scalar_lea.vmem [#allocation7], %s375
        %p377 = pneg %p244
        %p378 = pneg %p241
        %s379 = smul.u32 2, %s28
        %s380 = smul.u32 2, %s28
        %p381 = scmp.lt.s32.totalorder %s380, 1
        %s382 = scalar_select %p381, %s380, 1
        %s383 = scalar_lea.vmem %s6, %s382
        %s384 = smul.u32 2, %s28
        %s385 = smul.u32 2, %s28
        %s386 = smul.u32 2, %s28
        %p387 = scmp.eq.s32.totalorder %s29, 0
        // Predicated region
        $region87: #{squeezed_gru_s_forward.1} parent=81 // pred_check
          %p388 = pneg %p387
        $region88: #{squeezed_gru_s_forward.1} parent=81 // pred_check_branch
          %390 = sbr.rel (%p388) target = $region90
        $region89: #{squeezed_gru_s_forward.1} parent=81 // pred_region
          %v391 = vld [vmem:[%s383] sm:$0x1]
          %v392 = vld [vmem:[%s383 + $0x1] sm:$0x1]
          %v395 = vcombine.low %v391, %v392
          %v397 = vunpack.c.l.s4 1966171168
          %v398 = vunpack.c.0.s8 %v397
          %v399 = vlaneseq
          %v400 = vshrl.u32 %v399, 7
          %v401 = vsub.s32 %v398, %v400
          %v402 = vrot.slane %v395, %v401
          %v404 = vunpack.c.l.s4 1966171168
          %v405 = vunpack.c.0.s8 %v404
          %v406 = vlaneseq
          %v407 = vshrl.u32 %v406, 7
          %v408 = vsub.s32 %v405, %v407
          %v409 = vrot.slane %v402, %v408
          %vm411 = vcmask 254976
          %412 = vst.msk [vmem:[#allocation5] sm:$0x3] %vm411, %v409
        $region90: #{squeezed_gru_s_forward.1} parent=81 // pred_fallthru
          _
        %v413 = vld [vmem:[%s344] sm:$0xff]
        %v414 = vld [vmem:[%s344 + $0x8] sm:$0xff]
        %v415 = vld [vmem:[%s1] sm:$0xff]
        %v416 = vld [vmem:[%s1 + $0x8] sm:$0xff]
        %v417 = vld [vmem:[%s1 + $0x10] sm:$0xff]
        %v418 = vld [vmem:[%s1 + $0x18] sm:$0xff]
        %v419 = vld [vmem:[%s1 + $0x20] sm:$0xff]
        %v420 = vld [vmem:[%s1 + $0x28] sm:$0xff]
        %v421 = vld [vmem:[%s1 + $0x30] sm:$0xff]
        %v422 = vld [vmem:[%s1 + $0x38] sm:$0xff]
        %v423 = vld [vmem:[%s2] sm:$0x1]
        %v425 = vlaneseq
        %v426 = vshrl.u32 %v425, 7
        %v427 = vsub.s32 0, %v426
        %v428 = vrot.slane %v423, %v427
        %vm430 = vcmask 523264
        %v432 = vsel %vm430, %v413, 0
        %v435 = vsel %vm430, %v414, 0
        %437 = vmatprep.subr.mxu0 0.0
        %438 = vmatpush1.msra.mxu0 %v415
        %439 = vmatprep.subr.mxu0 0.0
        %440 = vmatpush1.msra.mxu0 %v416
        %441 = vmatprep.subr.mxu0 0.0
        %442 = vmatpush1.msra.mxu0 %v417
        %443 = vmatprep.subr.mxu0 0.0
        %444 = vmatpush1.msra.mxu0 %v418
        %445 = vmatprep.subr.mxu0 0.0
        %446 = vmatpush1.msra.mxu0 %v419
        %447 = vmatprep.subr.mxu0 0.0
        %448 = vmatpush1.msra.mxu0 %v420
        %449 = vmatprep.subr.mxu0 0.0
        %450 = vmatpush1.msra.mxu0 %v421
        %451 = vmatprep.subr.mxu0 0.0
        %452 = vmatpush1.msra.mxu0 %v422
        %453 = vmatprep.subr.mxu0 0.0
        %454 = vmatpush1.msra.mxu0 0.0
        %455 = vmatprep.subr.mxu0 0.0
        %456 = vmatpush1.msra.mxu0 0.0
        %457 = vmatprep.subr.mxu0 0.0
        %458 = vmatpush1.msra.mxu0 0.0
        %459 = vmatprep.subr.mxu0 0.0
        %460 = vmatpush1.msra.mxu0 0.0
        %461 = vmatprep.subr.mxu0 0.0
        %462 = vmatpush1.msra.mxu0 0.0
        %463 = vmatprep.subr.mxu0 0.0
        %464 = vmatpush1.msra.mxu0 0.0
        %465 = vmatprep.subr.mxu0 0.0
        %466 = vmatpush1.msra.mxu0 0.0
        %467 = vmatprep.subr.mxu0 0.0
        %468 = vmatpush1.msra.mxu0 0.0
        %469 = vmatprep.subr.mxu0 0.0
        %470 = vmatpush1.msra.mxu0 0.0
        %471 = vmatprep.subr.mxu0 0.0
        %472 = vmatpush1.msra.mxu0 0.0
        %473 = vmatprep.subr.mxu0 0.0
        %474 = vmatpush1.msra.mxu0 0.0
        %475 = vmatprep.subr.mxu0 0.0
        %476 = vmatpush1.msra.mxu0 0.0
        %477 = vmatprep.subr.mxu0 0.0
        %478 = vmatpush1.msra.mxu0 0.0
        %479 = vmatprep.subr.mxu0 0.0
        %480 = vmatpush1.msra.mxu0 0.0
        %481 = vmatprep.subr.mxu0 0.0
        %482 = vmatpush1.msra.mxu0 0.0
        %483 = vmatprep.subr.mxu0 0.0
        %484 = vmatpush1.msra.mxu0 0.0
        %485 = vmatprep.subr.mxu0 0.0
        %486 = vmatpush1.msra.mxu0 0.0
        %487 = vmatprep.subr.mxu0 0.0
        %488 = vmatpush1.msra.mxu0 0.0
        %489 = vmatprep.subr.mxu0 0.0
        %490 = vmatpush1.msra.mxu0 0.0
        %491 = vmatprep.subr.mxu0 0.0
        %492 = vmatpush1.msra.mxu0 0.0
        %493 = vmatprep.subr.mxu0 0.0
        %494 = vmatpush1.msra.mxu0 0.0
        %495 = vmatprep.subr.mxu0 0.0
        %496 = vmatpush1.msra.mxu0 0.0
        %497 = vmatprep.subr.mxu0 0.0
        %498 = vmatpush1.msra.mxu0 0.0
        %499 = vmatprep.subr.mxu0 0.0
        %500 = vmatpush1.msra.mxu0 0.0
        %501 = vmatprep.mubr.f32.mxu0 0.0
        %502 = vmatmul.mubr.f32.gmra.mrb[0].mxu0 %v432
        %v503 = vpop.f32.mrb[0].mxu0
        %v504 = vadd.f32 %v428, %v503
        %v505 = vpop.f32.mrb[0].mxu0
        %506 = vmatprep.mubr.f32.mxu0 0.0
        %507 = vmatmul.mubr.f32.gmra.mrb[0].mxu0 %v435
        %v508 = vpop.f32.mrb[0].mxu0
        %v509 = vadd.f32 %v428, %v508
        %v510 = vpop.f32.mrb[0].mxu0
        %511 = vdwg.mxu0
        %vm512 = vcmask 785408
        %513 = vst.msk [vmem:[#allocation2] sm:$0xff] %vm512, %v504
        %514 = vst.msk [vmem:[#allocation2 + $0x8] sm:$0xff] %vm512, %v509
        %v515 = vld [vmem:[%s3] sm:$0xff]
        %v516 = vld [vmem:[%s3 + $0x8] sm:$0xff]
        %v517 = vld [vmem:[%s3 + $0x10] sm:$0xff]
        %v518 = vld [vmem:[%s3 + $0x18] sm:$0xff]
        %v519 = vld [vmem:[%s4] sm:$0x1]
        %v520 = vld [vmem:[#allocation5] sm:$0x3]
        %v521 = vld [vmem:[#allocation2] ss:$8 sm:$0x3]
        %vm522 = vcmask 261120
        %v524 = vsel %vm522, %v520, 0
        %526 = vmatprep.subr.mxu0 0.0
        %527 = vmatpush1.msra.mxu0 %v515
        %528 = vmatprep.subr.mxu0 0.0
        %529 = vmatpush1.msra.mxu0 %v516
        %530 = vmatprep.subr.mxu0 0.0
        %531 = vmatpush1.msra.mxu0 %v517
        %532 = vmatprep.subr.mxu0 0.0
        %533 = vmatpush1.msra.mxu0 %v518
        %534 = vmatprep.subr.mxu0 0.0
        %535 = vmatpush1.msra.mxu0 0.0
        %536 = vmatprep.subr.mxu0 0.0
        %537 = vmatpush1.msra.mxu0 0.0
        %538 = vmatprep.subr.mxu0 0.0
        %539 = vmatpush1.msra.mxu0 0.0
        %540 = vmatprep.subr.mxu0 0.0
        %541 = vmatpush1.msra.mxu0 0.0
        %542 = vmatprep.subr.mxu0 0.0
        %543 = vmatpush1.msra.mxu0 0.0
        %544 = vmatprep.subr.mxu0 0.0
        %545 = vmatpush1.msra.mxu0 0.0
        %546 = vmatprep.subr.mxu0 0.0
        %547 = vmatpush1.msra.mxu0 0.0
        %548 = vmatprep.subr.mxu0 0.0
        %549 = vmatpush1.msra.mxu0 0.0
        %550 = vmatprep.subr.mxu0 0.0
        %551 = vmatpush1.msra.mxu0 0.0
        %552 = vmatprep.subr.mxu0 0.0
        %553 = vmatpush1.msra.mxu0 0.0
        %554 = vmatprep.subr.mxu0 0.0
        %555 = vmatpush1.msra.mxu0 0.0
        %556 = vmatprep.subr.mxu0 0.0
        %557 = vmatpush1.msra.mxu0 0.0
        %558 = vmatprep.subr.mxu0 0.0
        %559 = vmatpush1.msra.mxu0 0.0
        %560 = vmatprep.subr.mxu0 0.0
        %561 = vmatpush1.msra.mxu0 0.0
        %562 = vmatprep.subr.mxu0 0.0
        %563 = vmatpush1.msra.mxu0 0.0
        %564 = vmatprep.subr.mxu0 0.0
        %565 = vmatpush1.msra.mxu0 0.0
        %566 = vmatprep.subr.mxu0 0.0
        %567 = vmatpush1.msra.mxu0 0.0
        %568 = vmatprep.subr.mxu0 0.0
        %569 = vmatpush1.msra.mxu0 0.0
        %570 = vmatprep.subr.mxu0 0.0
        %571 = vmatpush1.msra.mxu0 0.0
        %572 = vmatprep.subr.mxu0 0.0
        %573 = vmatpush1.msra.mxu0 0.0
        %574 = vmatprep.subr.mxu0 0.0
        %575 = vmatpush1.msra.mxu0 0.0
        %576 = vmatprep.subr.mxu0 0.0
        %577 = vmatpush1.msra.mxu0 0.0
        %578 = vmatprep.subr.mxu0 0.0
        %579 = vmatpush1.msra.mxu0 0.0
        %580 = vmatprep.subr.mxu0 0.0
        %581 = vmatpush1.msra.mxu0 0.0
        %582 = vmatprep.subr.mxu0 0.0
        %583 = vmatpush1.msra.mxu0 0.0
        %584 = vmatprep.subr.mxu0 0.0
        %585 = vmatpush1.msra.mxu0 0.0
        %586 = vmatprep.subr.mxu0 0.0
        %587 = vmatpush1.msra.mxu0 0.0
        %588 = vmatprep.subr.mxu0 0.0
        %589 = vmatpush1.msra.mxu0 0.0
        %590 = vmatprep.mubr.f32.mxu0 0.0
        %591 = vmatmul.mubr.f32.gmra.mrb[0].mxu0 %v524
        %v592 = vpop.f32.mrb[0].mxu0
        %v593 = vadd.f32 0.0, %v592
        %v594 = vpop.f32.mrb[0].mxu0
        %595 = vdwg.mxu0
        %v596 = vadd.f32 %v521, %v593
        %v597 = vxor.u32 %v596, 2147483648
        %v598 = vmul.f32 %v597, 1.442695
        %v599 = vpow.pop %v598
        %v600 = vadd.f32 %v599, 1.0
        %v601 = vrcp.pop %v600
        %v602 = vmul.f32 1.0, %v601
        %v604 = vlaneseq
        %v605 = vshrl.u32 %v604, 7
        %v606 = vsub.s32 0, %v605
        %v607 = vrot.slane %v519, %v606
        %608 = vrot.lane.b32.xlu0 %v607, 64
        %v609 = vpop.permute.xlu0 %608
        %v611 = vadd.f32 %v593, %v609
        %613 = vrot.lane.b32.xlu0 %v611, 64
        %v614 = vpop.permute.xlu0 %613
        %v616 = vmul.f32 %v602, %v614
        %618 = vrot.lane.b32.xlu0 %v616, 64
        %v619 = vpop.permute.xlu0 %618
        %v621 = vadd.f32 %v521, %v619
        %v622 = vtanh.pop %v621
        %v623 = vsub.f32 1.0, %v602
        %625 = vrot.lane.b32.xlu0 %v622, 96
        %v626 = vpop.permute.xlu0 %625
        %v628 = vmul.f32 %v623, %v626
        %629 = vrot.lane.b32.xlu0 %v520, 32
        %v630 = vpop.permute.xlu0 %629
        %v632 = vmul.f32 %v602, %v630
        %v633 = vadd.f32 %v628, %v632
        %635 = vrot.lane.b32.xlu0 %v633, 96
        %v636 = vpop.permute.xlu0 %635
        %vm638 = vcmask 254976
        %639 = vst.msk [vmem:[#allocation3] sm:$0x3] %vm638, %v636
        %s640 = scalar_lea.vmem [#allocation2], 1
        %v641 = vld [vmem:[%s640] ss:$8 sm:$0x3]
        %v642 = vsel %vm522, %v636, 0
        %644 = vmatprep.subr.mxu0 0.0
        %645 = vmatpush1.msra.mxu0 %v515
        %646 = vmatprep.subr.mxu0 0.0
        %647 = vmatpush1.msra.mxu0 %v516
        %648 = vmatprep.subr.mxu0 0.0
        %649 = vmatpush1.msra.mxu0 %v517
        %650 = vmatprep.subr.mxu0 0.0
        %651 = vmatpush1.msra.mxu0 %v518
        %652 = vmatprep.subr.mxu0 0.0
        %653 = vmatpush1.msra.mxu0 0.0
        %654 = vmatprep.subr.mxu0 0.0
        %655 = vmatpush1.msra.mxu0 0.0
        %656 = vmatprep.subr.mxu0 0.0
        %657 = vmatpush1.msra.mxu0 0.0
        %658 = vmatprep.subr.mxu0 0.0
        %659 = vmatpush1.msra.mxu0 0.0
        %660 = vmatprep.subr.mxu0 0.0
        %661 = vmatpush1.msra.mxu0 0.0
        %662 = vmatprep.subr.mxu0 0.0
        %663 = vmatpush1.msra.mxu0 0.0
        %664 = vmatprep.subr.mxu0 0.0
        %665 = vmatpush1.msra.mxu0 0.0
        %666 = vmatprep.subr.mxu0 0.0
        %667 = vmatpush1.msra.mxu0 0.0
        %668 = vmatprep.subr.mxu0 0.0
        %669 = vmatpush1.msra.mxu0 0.0
        %670 = vmatprep.subr.mxu0 0.0
        %671 = vmatpush1.msra.mxu0 0.0
        %672 = vmatprep.subr.mxu0 0.0
        %673 = vmatpush1.msra.mxu0 0.0
        %674 = vmatprep.subr.mxu0 0.0
        %675 = vmatpush1.msra.mxu0 0.0
        %676 = vmatprep.subr.mxu0 0.0
        %677 = vmatpush1.msra.mxu0 0.0
        %678 = vmatprep.subr.mxu0 0.0
        %679 = vmatpush1.msra.mxu0 0.0
        %680 = vmatprep.subr.mxu0 0.0
        %681 = vmatpush1.msra.mxu0 0.0
        %682 = vmatprep.subr.mxu0 0.0
        %683 = vmatpush1.msra.mxu0 0.0
        %684 = vmatprep.subr.mxu0 0.0
        %685 = vmatpush1.msra.mxu0 0.0
        %686 = vmatprep.subr.mxu0 0.0
        %687 = vmatpush1.msra.mxu0 0.0
        %688 = vmatprep.subr.mxu0 0.0
        %689 = vmatpush1.msra.mxu0 0.0
        %690 = vmatprep.subr.mxu0 0.0
        %691 = vmatpush1.msra.mxu0 0.0
        %692 = vmatprep.subr.mxu0 0.0
        %693 = vmatpush1.msra.mxu0 0.0
        %694 = vmatprep.subr.mxu0 0.0
        %695 = vmatpush1.msra.mxu0 0.0
        %696 = vmatprep.subr.mxu0 0.0
        %697 = vmatpush1.msra.mxu0 0.0
        %698 = vmatprep.subr.mxu0 0.0
        %699 = vmatpush1.msra.mxu0 0.0
        %700 = vmatprep.subr.mxu0 0.0
        %701 = vmatpush1.msra.mxu0 0.0
        %702 = vmatprep.subr.mxu0 0.0
        %703 = vmatpush1.msra.mxu0 0.0
        %704 = vmatprep.subr.mxu0 0.0
        %705 = vmatpush1.msra.mxu0 0.0
        %706 = vmatprep.subr.mxu0 0.0
        %707 = vmatpush1.msra.mxu0 0.0
        %708 = vmatprep.mubr.f32.mxu0 0.0
        %709 = vmatmul.mubr.f32.gmra.mrb[0].mxu0 %v642
        %v710 = vpop.f32.mrb[0].mxu0
        %v711 = vadd.f32 0.0, %v710
        %v712 = vpop.f32.mrb[0].mxu0
        %713 = vdwg.mxu0
        %v714 = vadd.f32 %v641, %v711
        %v715 = vxor.u32 %v714, 2147483648
        %v716 = vmul.f32 %v715, 1.442695
        %v717 = vpow.pop %v716
        %v718 = vadd.f32 %v717, 1.0
        %v719 = vrcp.pop %v718
        %v720 = vmul.f32 1.0, %v719
        %v721 = vadd.f32 %v711, %v609
        %723 = vrot.lane.b32.xlu0 %v721, 64
        %v724 = vpop.permute.xlu0 %723
        %v726 = vmul.f32 %v720, %v724
        %728 = vrot.lane.b32.xlu0 %v726, 64
        %v729 = vpop.permute.xlu0 %728
        %v731 = vadd.f32 %v641, %v729
        %v732 = vtanh.pop %v731
        %v733 = vsub.f32 1.0, %v720
        %735 = vrot.lane.b32.xlu0 %v732, 96
        %v736 = vpop.permute.xlu0 %735
        %v738 = vmul.f32 %v733, %v736
        %v739 = vmul.f32 %v720, %v633
        %v740 = vadd.f32 %v738, %v739
        %742 = vrot.lane.b32.xlu0 %v740, 96
        %v743 = vpop.permute.xlu0 %742
        %745 = vst.msk [vmem:[#allocation3 + $0x2] sm:$0x3] %vm638, %v743
        %s746 = scalar_lea.vmem [#allocation2], 2
        %v747 = vld [vmem:[%s746] ss:$8 sm:$0x3]
        %v748 = vsel %vm522, %v743, 0
        %750 = vmatprep.subr.mxu0 0.0
        %751 = vmatpush1.msra.mxu0 %v515
        %752 = vmatprep.subr.mxu0 0.0
        %753 = vmatpush1.msra.mxu0 %v516
        %754 = vmatprep.subr.mxu0 0.0
        %755 = vmatpush1.msra.mxu0 %v517
        %756 = vmatprep.subr.mxu0 0.0
        %757 = vmatpush1.msra.mxu0 %v518
        %758 = vmatprep.subr.mxu0 0.0
        %759 = vmatpush1.msra.mxu0 0.0
        %760 = vmatprep.subr.mxu0 0.0
        %761 = vmatpush1.msra.mxu0 0.0
        %762 = vmatprep.subr.mxu0 0.0
        %763 = vmatpush1.msra.mxu0 0.0
        %764 = vmatprep.subr.mxu0 0.0
        %765 = vmatpush1.msra.mxu0 0.0
        %766 = vmatprep.subr.mxu0 0.0
        %767 = vmatpush1.msra.mxu0 0.0
        %768 = vmatprep.subr.mxu0 0.0
        %769 = vmatpush1.msra.mxu0 0.0
        %770 = vmatprep.subr.mxu0 0.0
        %771 = vmatpush1.msra.mxu0 0.0
        %772 = vmatprep.subr.mxu0 0.0
        %773 = vmatpush1.msra.mxu0 0.0
        %774 = vmatprep.subr.mxu0 0.0
        %775 = vmatpush1.msra.mxu0 0.0
        %776 = vmatprep.subr.mxu0 0.0
        %777 = vmatpush1.msra.mxu0 0.0
        %778 = vmatprep.subr.mxu0 0.0
        %779 = vmatpush1.msra.mxu0 0.0
        %780 = vmatprep.subr.mxu0 0.0
        %781 = vmatpush1.msra.mxu0 0.0
        %782 = vmatprep.subr.mxu0 0.0
        %783 = vmatpush1.msra.mxu0 0.0
        %784 = vmatprep.subr.mxu0 0.0
        %785 = vmatpush1.msra.mxu0 0.0
        %786 = vmatprep.subr.mxu0 0.0
        %787 = vmatpush1.msra.mxu0 0.0
        %788 = vmatprep.subr.mxu0 0.0
        %789 = vmatpush1.msra.mxu0 0.0
        %790 = vmatprep.subr.mxu0 0.0
        %791 = vmatpush1.msra.mxu0 0.0
        %792 = vmatprep.subr.mxu0 0.0
        %793 = vmatpush1.msra.mxu0 0.0
        %794 = vmatprep.subr.mxu0 0.0
        %795 = vmatpush1.msra.mxu0 0.0
        %796 = vmatprep.subr.mxu0 0.0
        %797 = vmatpush1.msra.mxu0 0.0
        %798 = vmatprep.subr.mxu0 0.0
        %799 = vmatpush1.msra.mxu0 0.0
        %800 = vmatprep.subr.mxu0 0.0
        %801 = vmatpush1.msra.mxu0 0.0
        %802 = vmatprep.subr.mxu0 0.0
        %803 = vmatpush1.msra.mxu0 0.0
        %804 = vmatprep.subr.mxu0 0.0
        %805 = vmatpush1.msra.mxu0 0.0
        %806 = vmatprep.subr.mxu0 0.0
        %807 = vmatpush1.msra.mxu0 0.0
        %808 = vmatprep.subr.mxu0 0.0
        %809 = vmatpush1.msra.mxu0 0.0
        %810 = vmatprep.subr.mxu0 0.0
        %811 = vmatpush1.msra.mxu0 0.0
        %812 = vmatprep.subr.mxu0 0.0
        %813 = vmatpush1.msra.mxu0 0.0
        %814 = vmatprep.mubr.f32.mxu0 0.0
        %815 = vmatmul.mubr.f32.gmra.mrb[0].mxu0 %v748
        %v816 = vpop.f32.mrb[0].mxu0
        %v817 = vadd.f32 0.0, %v816
        %v818 = vpop.f32.mrb[0].mxu0
        %819 = vdwg.mxu0
        %v820 = vadd.f32 %v747, %v817
        %v821 = vxor.u32 %v820, 2147483648
        %v822 = vmul.f32 %v821, 1.442695
        %v823 = vpow.pop %v822
        %v824 = vadd.f32 %v823, 1.0
        %v825 = vrcp.pop %v824
        %v826 = vmul.f32 1.0, %v825
        %v827 = vadd.f32 %v817, %v609
        %829 = vrot.lane.b32.xlu0 %v827, 64
        %v830 = vpop.permute.xlu0 %829
        %v832 = vmul.f32 %v826, %v830
        %834 = vrot.lane.b32.xlu0 %v832, 64
        %v835 = vpop.permute.xlu0 %834
        %v837 = vadd.f32 %v747, %v835
        %v838 = vtanh.pop %v837
        %v839 = vsub.f32 1.0, %v826
        %841 = vrot.lane.b32.xlu0 %v838, 96
        %v842 = vpop.permute.xlu0 %841
        %v844 = vmul.f32 %v839, %v842
        %v845 = vmul.f32 %v826, %v740
        %v846 = vadd.f32 %v844, %v845
        %848 = vrot.lane.b32.xlu0 %v846, 96
        %v849 = vpop.permute.xlu0 %848
        %851 = vst.msk [vmem:[#allocation3 + $0x4] sm:$0x3] %vm638, %v849
        %s852 = scalar_lea.vmem [#allocation2], 3
        %v853 = vld [vmem:[%s852] ss:$8 sm:$0x3]
        %v854 = vsel %vm522, %v849, 0
        %856 = vmatprep.subr.mxu0 0.0
        %857 = vmatpush1.msra.mxu0 %v515
        %858 = vmatprep.subr.mxu0 0.0
        %859 = vmatpush1.msra.mxu0 %v516
        %860 = vmatprep.subr.mxu0 0.0
        %861 = vmatpush1.msra.mxu0 %v517
        %862 = vmatprep.subr.mxu0 0.0
        %863 = vmatpush1.msra.mxu0 %v518
        %864 = vmatprep.subr.mxu0 0.0
        %865 = vmatpush1.msra.mxu0 0.0
        %866 = vmatprep.subr.mxu0 0.0
        %867 = vmatpush1.msra.mxu0 0.0
        %868 = vmatprep.subr.mxu0 0.0
        %869 = vmatpush1.msra.mxu0 0.0
        %870 = vmatprep.subr.mxu0 0.0
        %871 = vmatpush1.msra.mxu0 0.0
        %872 = vmatprep.subr.mxu0 0.0
        %873 = vmatpush1.msra.mxu0 0.0
        %874 = vmatprep.subr.mxu0 0.0
        %875 = vmatpush1.msra.mxu0 0.0
        %876 = vmatprep.subr.mxu0 0.0
        %877 = vmatpush1.msra.mxu0 0.0
        %878 = vmatprep.subr.mxu0 0.0
        %879 = vmatpush1.msra.mxu0 0.0
        %880 = vmatprep.subr.mxu0 0.0
        %881 = vmatpush1.msra.mxu0 0.0
        %882 = vmatprep.subr.mxu0 0.0
        %883 = vmatpush1.msra.mxu0 0.0
        %884 = vmatprep.subr.mxu0 0.0
        %885 = vmatpush1.msra.mxu0 0.0
        %886 = vmatprep.subr.mxu0 0.0
        %887 = vmatpush1.msra.mxu0 0.0
        %888 = vmatprep.subr.mxu0 0.0
        %889 = vmatpush1.msra.mxu0 0.0
        %890 = vmatprep.subr.mxu0 0.0
        %891 = vmatpush1.msra.mxu0 0.0
        %892 = vmatprep.subr.mxu0 0.0
        %893 = vmatpush1.msra.mxu0 0.0
        %894 = vmatprep.subr.mxu0 0.0
        %895 = vmatpush1.msra.mxu0 0.0
        %896 = vmatprep.subr.mxu0 0.0
        %897 = vmatpush1.msra.mxu0 0.0
        %898 = vmatprep.subr.mxu0 0.0
        %899 = vmatpush1.msra.mxu0 0.0
        %900 = vmatprep.subr.mxu0 0.0
        %901 = vmatpush1.msra.mxu0 0.0
        %902 = vmatprep.subr.mxu0 0.0
        %903 = vmatpush1.msra.mxu0 0.0
        %904 = vmatprep.subr.mxu0 0.0
        %905 = vmatpush1.msra.mxu0 0.0
        %906 = vmatprep.subr.mxu0 0.0
        %907 = vmatpush1.msra.mxu0 0.0
        %908 = vmatprep.subr.mxu0 0.0
        %909 = vmatpush1.msra.mxu0 0.0
        %910 = vmatprep.subr.mxu0 0.0
        %911 = vmatpush1.msra.mxu0 0.0
        %912 = vmatprep.subr.mxu0 0.0
        %913 = vmatpush1.msra.mxu0 0.0
        %914 = vmatprep.subr.mxu0 0.0
        %915 = vmatpush1.msra.mxu0 0.0
        %916 = vmatprep.subr.mxu0 0.0
        %917 = vmatpush1.msra.mxu0 0.0
        %918 = vmatprep.subr.mxu0 0.0
        %919 = vmatpush1.msra.mxu0 0.0
        %920 = vmatprep.mubr.f32.mxu0 0.0
        %921 = vmatmul.mubr.f32.gmra.mrb[0].mxu0 %v854
        %v922 = vpop.f32.mrb[0].mxu0
        %v923 = vadd.f32 0.0, %v922
        %v924 = vpop.f32.mrb[0].mxu0
        %925 = vdwg.mxu0
        %v926 = vadd.f32 %v853, %v923
        %v927 = vxor.u32 %v926, 2147483648
        %v928 = vmul.f32 %v927, 1.442695
        %v929 = vpow.pop %v928
        %v930 = vadd.f32 %v929, 1.0
        %v931 = vrcp.pop %v930
        %v932 = vmul.f32 1.0, %v931
        %v933 = vadd.f32 %v923, %v609
        %935 = vrot.lane.b32.xlu0 %v933, 64
        %v936 = vpop.permute.xlu0 %935
        %v938 = vmul.f32 %v932, %v936
        %940 = vrot.lane.b32.xlu0 %v938, 64
        %v941 = vpop.permute.xlu0 %940
        %v943 = vadd.f32 %v853, %v941
        %v944 = vtanh.pop %v943
        %v945 = vsub.f32 1.0, %v932
        %947 = vrot.lane.b32.xlu0 %v944, 96
        %v948 = vpop.permute.xlu0 %947
        %v950 = vmul.f32 %v945, %v948
        %v951 = vmul.f32 %v932, %v846
        %v952 = vadd.f32 %v950, %v951
        %954 = vrot.lane.b32.xlu0 %v952, 96
        %v955 = vpop.permute.xlu0 %954
        %957 = vst.msk [vmem:[#allocation3 + $0x6] sm:$0x3] %vm638, %v955
        %s958 = scalar_lea.vmem [#allocation2], 4
        %v959 = vld [vmem:[%s958] ss:$8 sm:$0x3]
        %v960 = vsel %vm522, %v955, 0
        %962 = vmatprep.subr.mxu0 0.0
        %963 = vmatpush1.msra.mxu0 %v515
        %964 = vmatprep.subr.mxu0 0.0
        %965 = vmatpush1.msra.mxu0 %v516
        %966 = vmatprep.subr.mxu0 0.0
        %967 = vmatpush1.msra.mxu0 %v517
        %968 = vmatprep.subr.mxu0 0.0
        %969 = vmatpush1.msra.mxu0 %v518
        %970 = vmatprep.subr.mxu0 0.0
        %971 = vmatpush1.msra.mxu0 0.0
        %972 = vmatprep.subr.mxu0 0.0
        %973 = vmatpush1.msra.mxu0 0.0
        %974 = vmatprep.subr.mxu0 0.0
        %975 = vmatpush1.msra.mxu0 0.0
        %976 = vmatprep.subr.mxu0 0.0
        %977 = vmatpush1.msra.mxu0 0.0
        %978 = vmatprep.subr.mxu0 0.0
        %979 = vmatpush1.msra.mxu0 0.0
        %980 = vmatprep.subr.mxu0 0.0
        %981 = vmatpush1.msra.mxu0 0.0
        %982 = vmatprep.subr.mxu0 0.0
        %983 = vmatpush1.msra.mxu0 0.0
        %984 = vmatprep.subr.mxu0 0.0
        %985 = vmatpush1.msra.mxu0 0.0
        %986 = vmatprep.subr.mxu0 0.0
        %987 = vmatpush1.msra.mxu0 0.0
        %988 = vmatprep.subr.mxu0 0.0
        %989 = vmatpush1.msra.mxu0 0.0
        %990 = vmatprep.subr.mxu0 0.0
        %991 = vmatpush1.msra.mxu0 0.0
        %992 = vmatprep.subr.mxu0 0.0
        %993 = vmatpush1.msra.mxu0 0.0
        %994 = vmatprep.subr.mxu0 0.0
        %995 = vmatpush1.msra.mxu0 0.0
        %996 = vmatprep.subr.mxu0 0.0
        %997 = vmatpush1.msra.mxu0 0.0
        %998 = vmatprep.subr.mxu0 0.0
        %999 = vmatpush1.msra.mxu0 0.0
        %1000 = vmatprep.subr.mxu0 0.0
        %1001 = vmatpush1.msra.mxu0 0.0
        %1002 = vmatprep.subr.mxu0 0.0
        %1003 = vmatpush1.msra.mxu0 0.0
        %1004 = vmatprep.subr.mxu0 0.0
        %1005 = vmatpush1.msra.mxu0 0.0
        %1006 = vmatprep.subr.mxu0 0.0
        %1007 = vmatpush1.msra.mxu0 0.0
        %1008 = vmatprep.subr.mxu0 0.0
        %1009 = vmatpush1.msra.mxu0 0.0
        %1010 = vmatprep.subr.mxu0 0.0
        %1011 = vmatpush1.msra.mxu0 0.0
        %1012 = vmatprep.subr.mxu0 0.0
        %1013 = vmatpush1.msra.mxu0 0.0
        %1014 = vmatprep.subr.mxu0 0.0
        %1015 = vmatpush1.msra.mxu0 0.0
        %1016 = vmatprep.subr.mxu0 0.0
        %1017 = vmatpush1.msra.mxu0 0.0
        %1018 = vmatprep.subr.mxu0 0.0
        %1019 = vmatpush1.msra.mxu0 0.0
        %1020 = vmatprep.subr.mxu0 0.0
        %1021 = vmatpush1.msra.mxu0 0.0
        %1022 = vmatprep.subr.mxu0 0.0
        %1023 = vmatpush1.msra.mxu0 0.0
        %1024 = vmatprep.subr.mxu0 0.0
        %1025 = vmatpush1.msra.mxu0 0.0
        %1026 = vmatprep.mubr.f32.mxu0 0.0
        %1027 = vmatmul.mubr.f32.gmra.mrb[0].mxu0 %v960
        %v1028 = vpop.f32.mrb[0].mxu0
        %v1029 = vadd.f32 0.0, %v1028
        %v1030 = vpop.f32.mrb[0].mxu0
        %1031 = vdwg.mxu0
        %v1032 = vadd.f32 %v959, %v1029
        %v1033 = vxor.u32 %v1032, 2147483648
        %v1034 = vmul.f32 %v1033, 1.442695
        %v1035 = vpow.pop %v1034
        %v1036 = vadd.f32 %v1035, 1.0
        %v1037 = vrcp.pop %v1036
        %v1038 = vmul.f32 1.0, %v1037
        %v1039 = vadd.f32 %v1029, %v609
        %1041 = vrot.lane.b32.xlu0 %v1039, 64
        %v1042 = vpop.permute.xlu0 %1041
        %v1044 = vmul.f32 %v1038, %v1042
        %1046 = vrot.lane.b32.xlu0 %v1044, 64
        %v1047 = vpop.permute.xlu0 %1046
        %v1049 = vadd.f32 %v959, %v1047
        %v1050 = vtanh.pop %v1049
        %v1051 = vsub.f32 1.0, %v1038
        %1053 = vrot.lane.b32.xlu0 %v1050, 96
        %v1054 = vpop.permute.xlu0 %1053
        %v1056 = vmul.f32 %v1051, %v1054
        %v1057 = vmul.f32 %v1038, %v952
        %v1058 = vadd.f32 %v1056, %v1057
        %1060 = vrot.lane.b32.xlu0 %v1058, 96
        %v1061 = vpop.permute.xlu0 %1060
        %1063 = vst.msk [vmem:[#allocation3 + $0x8] sm:$0x3] %vm638, %v1061
        %s1064 = scalar_lea.vmem [#allocation2], 5
        %v1065 = vld [vmem:[%s1064] ss:$8 sm:$0x3]
        %v1066 = vsel %vm522, %v1061, 0
        %1068 = vmatprep.subr.mxu0 0.0
        %1069 = vmatpush1.msra.mxu0 %v515
        %1070 = vmatprep.subr.mxu0 0.0
        %1071 = vmatpush1.msra.mxu0 %v516
        %1072 = vmatprep.subr.mxu0 0.0
        %1073 = vmatpush1.msra.mxu0 %v517
        %1074 = vmatprep.subr.mxu0 0.0
        %1075 = vmatpush1.msra.mxu0 %v518
        %1076 = vmatprep.subr.mxu0 0.0
        %1077 = vmatpush1.msra.mxu0 0.0
        %1078 = vmatprep.subr.mxu0 0.0
        %1079 = vmatpush1.msra.mxu0 0.0
        %1080 = vmatprep.subr.mxu0 0.0
        %1081 = vmatpush1.msra.mxu0 0.0
        %1082 = vmatprep.subr.mxu0 0.0
        %1083 = vmatpush1.msra.mxu0 0.0
        %1084 = vmatprep.subr.mxu0 0.0
        %1085 = vmatpush1.msra.mxu0 0.0
        %1086 = vmatprep.subr.mxu0 0.0
        %1087 = vmatpush1.msra.mxu0 0.0
        %1088 = vmatprep.subr.mxu0 0.0
        %1089 = vmatpush1.msra.mxu0 0.0
        %1090 = vmatprep.subr.mxu0 0.0
        %1091 = vmatpush1.msra.mxu0 0.0
        %1092 = vmatprep.subr.mxu0 0.0
        %1093 = vmatpush1.msra.mxu0 0.0
        %1094 = vmatprep.subr.mxu0 0.0
        %1095 = vmatpush1.msra.mxu0 0.0
        %1096 = vmatprep.subr.mxu0 0.0
        %1097 = vmatpush1.msra.mxu0 0.0
        %1098 = vmatprep.subr.mxu0 0.0
        %1099 = vmatpush1.msra.mxu0 0.0
        %1100 = vmatprep.subr.mxu0 0.0
        %1101 = vmatpush1.msra.mxu0 0.0
        %1102 = vmatprep.subr.mxu0 0.0
        %1103 = vmatpush1.msra.mxu0 0.0
        %1104 = vmatprep.subr.mxu0 0.0
        %1105 = vmatpush1.msra.mxu0 0.0
        %1106 = vmatprep.subr.mxu0 0.0
        %1107 = vmatpush1.msra.mxu0 0.0
        %1108 = vmatprep.subr.mxu0 0.0
        %1109 = vmatpush1.msra.mxu0 0.0
        %1110 = vmatprep.subr.mxu0 0.0
        %1111 = vmatpush1.msra.mxu0 0.0
        %1112 = vmatprep.subr.mxu0 0.0
        %1113 = vmatpush1.msra.mxu0 0.0
        %1114 = vmatprep.subr.mxu0 0.0
        %1115 = vmatpush1.msra.mxu0 0.0
        %1116 = vmatprep.subr.mxu0 0.0
        %1117 = vmatpush1.msra.mxu0 0.0
        %1118 = vmatprep.subr.mxu0 0.0
        %1119 = vmatpush1.msra.mxu0 0.0
        %1120 = vmatprep.subr.mxu0 0.0
        %1121 = vmatpush1.msra.mxu0 0.0
        %1122 = vmatprep.subr.mxu0 0.0
        %1123 = vmatpush1.msra.mxu0 0.0
        %1124 = vmatprep.subr.mxu0 0.0
        %1125 = vmatpush1.msra.mxu0 0.0
        %1126 = vmatprep.subr.mxu0 0.0
        %1127 = vmatpush1.msra.mxu0 0.0
        %1128 = vmatprep.subr.mxu0 0.0
        %1129 = vmatpush1.msra.mxu0 0.0
        %1130 = vmatprep.subr.mxu0 0.0
        %1131 = vmatpush1.msra.mxu0 0.0
        %1132 = vmatprep.mubr.f32.mxu0 0.0
        %1133 = vmatmul.mubr.f32.gmra.mrb[0].mxu0 %v1066
        %v1134 = vpop.f32.mrb[0].mxu0
        %v1135 = vadd.f32 0.0, %v1134
        %v1136 = vpop.f32.mrb[0].mxu0
        %1137 = vdwg.mxu0
        %v1138 = vadd.f32 %v1065, %v1135
        %v1139 = vxor.u32 %v1138, 2147483648
        %v1140 = vmul.f32 %v1139, 1.442695
        %v1141 = vpow.pop %v1140
        %v1142 = vadd.f32 %v1141, 1.0
        %v1143 = vrcp.pop %v1142
        %v1144 = vmul.f32 1.0, %v1143
        %v1145 = vadd.f32 %v1135, %v609
        %1147 = vrot.lane.b32.xlu0 %v1145, 64
        %v1148 = vpop.permute.xlu0 %1147
        %v1150 = vmul.f32 %v1144, %v1148
        %1152 = vrot.lane.b32.xlu0 %v1150, 64
        %v1153 = vpop.permute.xlu0 %1152
        %v1155 = vadd.f32 %v1065, %v1153
        %v1156 = vtanh.pop %v1155
        %v1157 = vsub.f32 1.0, %v1144
        %1159 = vrot.lane.b32.xlu0 %v1156, 96
        %v1160 = vpop.permute.xlu0 %1159
        %v1162 = vmul.f32 %v1157, %v1160
        %v1163 = vmul.f32 %v1144, %v1058
        %v1164 = vadd.f32 %v1162, %v1163
        %1166 = vrot.lane.b32.xlu0 %v1164, 96
        %v1167 = vpop.permute.xlu0 %1166
        %1169 = vst.msk [vmem:[#allocation3 + $0xa] sm:$0x3] %vm638, %v1167
        %s1170 = scalar_lea.vmem [#allocation2], 6
        %v1171 = vld [vmem:[%s1170] ss:$8 sm:$0x3]
        %v1172 = vsel %vm522, %v1167, 0
        %1174 = vmatprep.subr.mxu0 0.0
        %1175 = vmatpush1.msra.mxu0 %v515
        %1176 = vmatprep.subr.mxu0 0.0
        %1177 = vmatpush1.msra.mxu0 %v516
        %1178 = vmatprep.subr.mxu0 0.0
        %1179 = vmatpush1.msra.mxu0 %v517
        %1180 = vmatprep.subr.mxu0 0.0
        %1181 = vmatpush1.msra.mxu0 %v518
        %1182 = vmatprep.subr.mxu0 0.0
        %1183 = vmatpush1.msra.mxu0 0.0
        %1184 = vmatprep.subr.mxu0 0.0
        %1185 = vmatpush1.msra.mxu0 0.0
        %1186 = vmatprep.subr.mxu0 0.0
        %1187 = vmatpush1.msra.mxu0 0.0
        %1188 = vmatprep.subr.mxu0 0.0
        %1189 = vmatpush1.msra.mxu0 0.0
        %1190 = vmatprep.subr.mxu0 0.0
        %1191 = vmatpush1.msra.mxu0 0.0
        %1192 = vmatprep.subr.mxu0 0.0
        %1193 = vmatpush1.msra.mxu0 0.0
        %1194 = vmatprep.subr.mxu0 0.0
        %1195 = vmatpush1.msra.mxu0 0.0
        %1196 = vmatprep.subr.mxu0 0.0
        %1197 = vmatpush1.msra.mxu0 0.0
        %1198 = vmatprep.subr.mxu0 0.0
        %1199 = vmatpush1.msra.mxu0 0.0
        %1200 = vmatprep.subr.mxu0 0.0
        %1201 = vmatpush1.msra.mxu0 0.0
        %1202 = vmatprep.subr.mxu0 0.0
        %1203 = vmatpush1.msra.mxu0 0.0
        %1204 = vmatprep.subr.mxu0 0.0
        %1205 = vmatpush1.msra.mxu0 0.0
        %1206 = vmatprep.subr.mxu0 0.0
        %1207 = vmatpush1.msra.mxu0 0.0
        %1208 = vmatprep.subr.mxu0 0.0
        %1209 = vmatpush1.msra.mxu0 0.0
        %1210 = vmatprep.subr.mxu0 0.0
        %1211 = vmatpush1.msra.mxu0 0.0
        %1212 = vmatprep.subr.mxu0 0.0
        %1213 = vmatpush1.msra.mxu0 0.0
        %1214 = vmatprep.subr.mxu0 0.0
        %1215 = vmatpush1.msra.mxu0 0.0
        %1216 = vmatprep.subr.mxu0 0.0
        %1217 = vmatpush1.msra.mxu0 0.0
        %1218 = vmatprep.subr.mxu0 0.0
        %1219 = vmatpush1.msra.mxu0 0.0
        %1220 = vmatprep.subr.mxu0 0.0
        %1221 = vmatpush1.msra.mxu0 0.0
        %1222 = vmatprep.subr.mxu0 0.0
        %1223 = vmatpush1.msra.mxu0 0.0
        %1224 = vmatprep.subr.mxu0 0.0
        %1225 = vmatpush1.msra.mxu0 0.0
        %1226 = vmatprep.subr.mxu0 0.0
        %1227 = vmatpush1.msra.mxu0 0.0
        %1228 = vmatprep.subr.mxu0 0.0
        %1229 = vmatpush1.msra.mxu0 0.0
        %1230 = vmatprep.subr.mxu0 0.0
        %1231 = vmatpush1.msra.mxu0 0.0
        %1232 = vmatprep.subr.mxu0 0.0
        %1233 = vmatpush1.msra.mxu0 0.0
        %1234 = vmatprep.subr.mxu0 0.0
        %1235 = vmatpush1.msra.mxu0 0.0
        %1236 = vmatprep.subr.mxu0 0.0
        %1237 = vmatpush1.msra.mxu0 0.0
        %1238 = vmatprep.mubr.f32.mxu0 0.0
        %1239 = vmatmul.mubr.f32.gmra.mrb[0].mxu0 %v1172
        %v1240 = vpop.f32.mrb[0].mxu0
        %v1241 = vadd.f32 0.0, %v1240
        %v1242 = vpop.f32.mrb[0].mxu0
        %1243 = vdwg.mxu0
        %v1244 = vadd.f32 %v1171, %v1241
        %v1245 = vxor.u32 %v1244, 2147483648
        %v1246 = vmul.f32 %v1245, 1.442695
        %v1247 = vpow.pop %v1246
        %v1248 = vadd.f32 %v1247, 1.0
        %v1249 = vrcp.pop %v1248
        %v1250 = vmul.f32 1.0, %v1249
        %v1251 = vadd.f32 %v1241, %v609
        %1253 = vrot.lane.b32.xlu0 %v1251, 64
        %v1254 = vpop.permute.xlu0 %1253
        %v1256 = vmul.f32 %v1250, %v1254
        %1258 = vrot.lane.b32.xlu0 %v1256, 64
        %v1259 = vpop.permute.xlu0 %1258
        %v1261 = vadd.f32 %v1171, %v1259
        %v1262 = vtanh.pop %v1261
        %v1263 = vsub.f32 1.0, %v1250
        %1265 = vrot.lane.b32.xlu0 %v1262, 96
        %v1266 = vpop.permute.xlu0 %1265
        %v1268 = vmul.f32 %v1263, %v1266
        %v1269 = vmul.f32 %v1250, %v1164
        %v1270 = vadd.f32 %v1268, %v1269
        %1272 = vrot.lane.b32.xlu0 %v1270, 96
        %v1273 = vpop.permute.xlu0 %1272
        %1275 = vst.msk [vmem:[#allocation3 + $0xc] sm:$0x3] %vm638, %v1273
        %s1276 = scalar_lea.vmem [#allocation2], 7
        %v1277 = vld [vmem:[%s1276] ss:$8 sm:$0x3]
        %v1278 = vsel %vm522, %v1273, 0
        %1280 = vmatprep.subr.mxu0 0.0
        %1281 = vmatpush1.msra.mxu0 %v515
        %1282 = vmatprep.subr.mxu0 0.0
        %1283 = vmatpush1.msra.mxu0 %v516
        %1284 = vmatprep.subr.mxu0 0.0
        %1285 = vmatpush1.msra.mxu0 %v517
        %1286 = vmatprep.subr.mxu0 0.0
        %1287 = vmatpush1.msra.mxu0 %v518
        %1288 = vmatprep.subr.mxu0 0.0
        %1289 = vmatpush1.msra.mxu0 0.0
        %1290 = vmatprep.subr.mxu0 0.0
        %1291 = vmatpush1.msra.mxu0 0.0
        %1292 = vmatprep.subr.mxu0 0.0
        %1293 = vmatpush1.msra.mxu0 0.0
        %1294 = vmatprep.subr.mxu0 0.0
        %1295 = vmatpush1.msra.mxu0 0.0
        %1296 = vmatprep.subr.mxu0 0.0
        %1297 = vmatpush1.msra.mxu0 0.0
        %1298 = vmatprep.subr.mxu0 0.0
        %1299 = vmatpush1.msra.mxu0 0.0
        %1300 = vmatprep.subr.mxu0 0.0
        %1301 = vmatpush1.msra.mxu0 0.0
        %1302 = vmatprep.subr.mxu0 0.0
        %1303 = vmatpush1.msra.mxu0 0.0
        %1304 = vmatprep.subr.mxu0 0.0
        %1305 = vmatpush1.msra.mxu0 0.0
        %1306 = vmatprep.subr.mxu0 0.0
        %1307 = vmatpush1.msra.mxu0 0.0
        %1308 = vmatprep.subr.mxu0 0.0
        %1309 = vmatpush1.msra.mxu0 0.0
        %1310 = vmatprep.subr.mxu0 0.0
        %1311 = vmatpush1.msra.mxu0 0.0
        %1312 = vmatprep.subr.mxu0 0.0
        %1313 = vmatpush1.msra.mxu0 0.0
        %1314 = vmatprep.subr.mxu0 0.0
        %1315 = vmatpush1.msra.mxu0 0.0
        %1316 = vmatprep.subr.mxu0 0.0
        %1317 = vmatpush1.msra.mxu0 0.0
        %1318 = vmatprep.subr.mxu0 0.0
        %1319 = vmatpush1.msra.mxu0 0.0
        %1320 = vmatprep.subr.mxu0 0.0
        %1321 = vmatpush1.msra.mxu0 0.0
        %1322 = vmatprep.subr.mxu0 0.0
        %1323 = vmatpush1.msra.mxu0 0.0
        %1324 = vmatprep.subr.mxu0 0.0
        %1325 = vmatpush1.msra.mxu0 0.0
        %1326 = vmatprep.subr.mxu0 0.0
        %1327 = vmatpush1.msra.mxu0 0.0
        %1328 = vmatprep.subr.mxu0 0.0
        %1329 = vmatpush1.msra.mxu0 0.0
        %1330 = vmatprep.subr.mxu0 0.0
        %1331 = vmatpush1.msra.mxu0 0.0
        %1332 = vmatprep.subr.mxu0 0.0
        %1333 = vmatpush1.msra.mxu0 0.0
        %1334 = vmatprep.subr.mxu0 0.0
        %1335 = vmatpush1.msra.mxu0 0.0
        %1336 = vmatprep.subr.mxu0 0.0
        %1337 = vmatpush1.msra.mxu0 0.0
        %1338 = vmatprep.subr.mxu0 0.0
        %1339 = vmatpush1.msra.mxu0 0.0
        %1340 = vmatprep.subr.mxu0 0.0
        %1341 = vmatpush1.msra.mxu0 0.0
        %1342 = vmatprep.subr.mxu0 0.0
        %1343 = vmatpush1.msra.mxu0 0.0
        %1344 = vmatprep.mubr.f32.mxu0 0.0
        %1345 = vmatmul.mubr.f32.gmra.mrb[0].mxu0 %v1278
        %v1346 = vpop.f32.mrb[0].mxu0
        %v1347 = vadd.f32 0.0, %v1346
        %v1348 = vpop.f32.mrb[0].mxu0
        %1349 = vdwg.mxu0
        %v1350 = vadd.f32 %v1277, %v1347
        %v1351 = vxor.u32 %v1350, 2147483648
        %v1352 = vmul.f32 %v1351, 1.442695
        %v1353 = vpow.pop %v1352
        %v1354 = vadd.f32 %v1353, 1.0
        %v1355 = vrcp.pop %v1354
        %v1356 = vmul.f32 1.0, %v1355
        %v1357 = vadd.f32 %v1347, %v609
        %1359 = vrot.lane.b32.xlu0 %v1357, 64
        %v1360 = vpop.permute.xlu0 %1359
        %v1362 = vmul.f32 %v1356, %v1360
        %1364 = vrot.lane.b32.xlu0 %v1362, 64
        %v1365 = vpop.permute.xlu0 %1364
        %v1367 = vadd.f32 %v1277, %v1365
        %v1368 = vtanh.pop %v1367
        %v1369 = vsub.f32 1.0, %v1356
        %1371 = vrot.lane.b32.xlu0 %v1368, 96
        %v1372 = vpop.permute.xlu0 %1371
        %v1374 = vmul.f32 %v1369, %v1372
        %v1375 = vmul.f32 %v1356, %v1270
        %v1376 = vadd.f32 %v1374, %v1375
        %1378 = vrot.lane.b32.xlu0 %v1376, 96
        %v1379 = vpop.permute.xlu0 %1378
        %1381 = vst.msk [vmem:[#allocation3 + $0xe] sm:$0x3] %vm638, %v1379
        %1382 = vst.msk [vmem:[#allocation5] sm:$0x3] %vm638, %v1379
        %p1383 = scmp.eq.s32.totalorder %s29, 1
        // Predicated region
        $region91: #{squeezed_gru_s_forward.1} parent=81 // pred_check
          %p1384 = pneg %p1383
        $region92: #{squeezed_gru_s_forward.1} parent=81 // pred_check_branch
          %1386 = sbr.rel (%p1384) target = $region94
        $region93: #{squeezed_gru_s_forward.1} parent=81 // pred_region
          %v1388 = vunpack.c.l.s4 1966171168
          %v1389 = vunpack.c.0.s8 %v1388
          %v1390 = vlaneseq
          %v1391 = vshrl.u32 %v1390, 7
          %v1392 = vsub.s32 %v1389, %v1391
          %v1393 = vrot.slane %v1376, %v1392
          %v1394 = vcombine.high %v1393, %v1393
          %v1396 = vunpack.c.l.s4 1966171168
          %v1397 = vunpack.c.0.s8 %v1396
          %v1398 = vlaneseq
          %v1399 = vshrl.u32 %v1398, 7
          %v1400 = vsub.s32 %v1397, %v1399
          %v1401 = vrot.slane %v1393, %v1400
          %v1403 = vunpack.c.l.s4 1966171168
          %v1404 = vunpack.c.0.s8 %v1403
          %v1405 = vlaneseq
          %v1406 = vshrl.u32 %v1405, 7
          %v1407 = vsub.s32 %v1404, %v1406
          %v1408 = vrot.slane %v1394, %v1407
          %v1409 = vlaneseq
          %v1410 = vshrl.u32 %v1409, 7
          %v1411 = vsub.s32 0, %v1410
          %v1412 = vrot.slane %v1401, %v1411
          %v1413 = vlaneseq
          %v1414 = vshrl.u32 %v1413, 7
          %v1415 = vsub.s32 0, %v1414
          %v1416 = vrot.slane %v1408, %v1415
          %1417 = vrot.lane.b32.xlu0 %v1412, 96
          %v1418 = vpop.permute.xlu0 %1417
          %1419 = vrot.lane.b32.xlu0 %v1416, 96
          %v1420 = vpop.permute.xlu0 %1419
          %vm1423 = vcmask 253952
          %1424 = vst.msk [vmem:[#allocation9] sm:$0x1] %vm1423, %v1418
          %1425 = vst.msk [vmem:[#allocation9 + $0x1] sm:$0x1] %vm1423, %v1420
        $region94: #{squeezed_gru_s_forward.1} parent=81 // pred_fallthru
          _
        %v1426 = vld [vmem:[#allocation3] sm:$0xff]
        %v1427 = vld [vmem:[#allocation3 + $0x8] sm:$0xff]
        %v1428 = vld [vmem:[%s5] sm:$0xff]
        %v1429 = vld [vmem:[%s5 + $0x8] sm:$0xff]
        %v1430 = vld [vmem:[%s5 + $0x10] sm:$0xff]
        %v1431 = vld [vmem:[%s5 + $0x18] sm:$0xff]
        %v1433 = vsel %vm522, %v1426, 0
        %v1436 = vsel %vm522, %v1427, 0
        %1438 = vmatprep.subr.mxu0 0.0
        %1439 = vmatpush1.msra.mxu0 %v1428
        %1440 = vmatprep.subr.mxu0 0.0
        %1441 = vmatpush1.msra.mxu0 %v1429
        %1442 = vmatprep.subr.mxu0 0.0
        %1443 = vmatpush1.msra.mxu0 %v1430
        %1444 = vmatprep.subr.mxu0 0.0
        %1445 = vmatpush1.msra.mxu0 %v1431
        %1446 = vmatprep.subr.mxu0 0.0
        %1447 = vmatpush1.msra.mxu0 0.0
        %1448 = vmatprep.subr.mxu0 0.0
        %1449 = vmatpush1.msra.mxu0 0.0
        %1450 = vmatprep.subr.mxu0 0.0
        %1451 = vmatpush1.msra.mxu0 0.0
        %1452 = vmatprep.subr.mxu0 0.0
        %1453 = vmatpush1.msra.mxu0 0.0
        %1454 = vmatprep.subr.mxu0 0.0
        %1455 = vmatpush1.msra.mxu0 0.0
        %1456 = vmatprep.subr.mxu0 0.0
        %1457 = vmatpush1.msra.mxu0 0.0
        %1458 = vmatprep.subr.mxu0 0.0
        %1459 = vmatpush1.msra.mxu0 0.0
        %1460 = vmatprep.subr.mxu0 0.0
        %1461 = vmatpush1.msra.mxu0 0.0
        %1462 = vmatprep.subr.mxu0 0.0
        %1463 = vmatpush1.msra.mxu0 0.0
        %1464 = vmatprep.subr.mxu0 0.0
        %1465 = vmatpush1.msra.mxu0 0.0
        %1466 = vmatprep.subr.mxu0 0.0
        %1467 = vmatpush1.msra.mxu0 0.0
        %1468 = vmatprep.subr.mxu0 0.0
        %1469 = vmatpush1.msra.mxu0 0.0
        %1470 = vmatprep.subr.mxu0 0.0
        %1471 = vmatpush1.msra.mxu0 0.0
        %1472 = vmatprep.subr.mxu0 0.0
        %1473 = vmatpush1.msra.mxu0 0.0
        %1474 = vmatprep.subr.mxu0 0.0
        %1475 = vmatpush1.msra.mxu0 0.0
        %1476 = vmatprep.subr.mxu0 0.0
        %1477 = vmatpush1.msra.mxu0 0.0
        %1478 = vmatprep.subr.mxu0 0.0
        %1479 = vmatpush1.msra.mxu0 0.0
        %1480 = vmatprep.subr.mxu0 0.0
        %1481 = vmatpush1.msra.mxu0 0.0
        %1482 = vmatprep.subr.mxu0 0.0
        %1483 = vmatpush1.msra.mxu0 0.0
        %1484 = vmatprep.subr.mxu0 0.0
        %1485 = vmatpush1.msra.mxu0 0.0
        %1486 = vmatprep.subr.mxu0 0.0
        %1487 = vmatpush1.msra.mxu0 0.0
        %1488 = vmatprep.subr.mxu0 0.0
        %1489 = vmatpush1.msra.mxu0 0.0
        %1490 = vmatprep.subr.mxu0 0.0
        %1491 = vmatpush1.msra.mxu0 0.0
        %1492 = vmatprep.subr.mxu0 0.0
        %1493 = vmatpush1.msra.mxu0 0.0
        %1494 = vmatprep.subr.mxu0 0.0
        %1495 = vmatpush1.msra.mxu0 0.0
        %1496 = vmatprep.subr.mxu0 0.0
        %1497 = vmatpush1.msra.mxu0 0.0
        %1498 = vmatprep.subr.mxu0 0.0
        %1499 = vmatpush1.msra.mxu0 0.0
        %1500 = vmatprep.subr.mxu0 0.0
        %1501 = vmatpush1.msra.mxu0 0.0
        %1502 = vmatprep.mubr.f32.mxu0 0.0
        %1503 = vmatmul.mubr.f32.gmra.mrb[0].mxu0 %v1433
        %v1504 = vpop.f32.mrb[0].mxu0
        %v1505 = vadd.f32 0.0, %v1504
        %v1506 = vpop.f32.mrb[0].mxu0
        %1507 = vmatprep.mubr.f32.mxu0 0.0
        %1508 = vmatmul.mubr.f32.gmra.mrb[0].mxu0 %v1436
        %v1509 = vpop.f32.mrb[0].mxu0
        %v1510 = vadd.f32 0.0, %v1509
        %v1511 = vpop.f32.mrb[0].mxu0
        %1512 = vdwg.mxu0
        %1513 = vst.msk [vmem:[#allocation4] sm:$0xff] %vm522, %v1505
        %1514 = vst.msk [vmem:[#allocation4 + $0x8] sm:$0xff] %vm522, %v1510
        %v1515 = vld [vmem:[#allocation4] ss:$2 sm:$0xff]
        %1516 = vst.msk [vmem:[%s376] sm:$0xff] %vm522, %v1515
        %s1517 = scalar_lea.vmem [#allocation4], 1
        %v1518 = vld [vmem:[%s1517] ss:$2 sm:$0xff]
        %s1519 = scalar_lea.vmem %s376, 8 [#allocation7]
        %1520 = vst.msk [vmem:[%s1519] sm:$0xff] %vm522, %v1518
        %s1521 = sand.u32 %s205, 1
        %s1522 = scalar_lea.sflag [#allocation8], %s1521
        %s1523 = sand.u32 %s205, 1
        %s1524 = smul.addr %s1523, 16
        %s1525 = scalar_lea.vmem [#allocation7], %s1524
        // Predicated region
        $region95: #{squeezed_gru_s_forward.1} parent=81 // pred_check
          %p1526 = pneg %p215
        $region96: #{squeezed_gru_s_forward.1} parent=81 // pred_check_branch
          %1528 = sbr.rel (%p1526) target = $region98
        $region97: #{squeezed_gru_s_forward.1} parent=81 // pred_region
          %s1529 = smul.u32 2, %s28
          %s1531 = ssub.s32 256, 256
          %1532 = vsyncadd %s1522, %s1531
          %s1533 = smul.addr %s1529, 2
          %s1534 = sadd.s32 %s29, %s1533
          %s1535 = smul.addr %s1534, 128
          %s1536 = scalar_lea.hbm %s7, %s1535
          %s1537 = sshll.u32 %s1525, 4
          %s1538 = int_to_ptr.vmem [resolvable:$true] %s1537
          %1543 = dma.vmem_to_hbm [thread:$0]  %s1538, 256, %s1536, %s1522, 128, 256, 8
        $region98: #{squeezed_gru_s_forward.1} parent=81 // pred_fallthru
          _
        // Predicated region
        $region99: #{squeezed_gru_s_forward.1} parent=81 // pred_check
          %p1544 = pneg %p241
        $region100: #{squeezed_gru_s_forward.1} parent=81 // pred_check_branch
          %1546 = sbr.rel (%p1544) target = $region102
        $region101: #{squeezed_gru_s_forward.1} parent=81 // pred_region
          %s1547 = smul.u32 2, %s28
          %s1549 = ssub.s32 32, 32
          %1550 = vsyncadd [#allocation10], %s1549
          %s1551 = smul.addr %s1547, 16
          %s1552 = scalar_lea.hbm %s8, %s1551
          %s1553 = sshll.u32 [#allocation9], 4
          %s1554 = int_to_ptr.vmem [resolvable:$true] %s1553
          %1559 = dma.vmem_to_hbm [thread:$0]  %s1554, 32, %s1552, [#allocation10], 16, 16, 1
        $region102: #{squeezed_gru_s_forward.1} parent=81 // pred_fallthru
          _
        // Predicated region
        $region103: #{squeezed_gru_s_forward.1} parent=81 // pred_check
          %p1560 = pneg %p241
        $region104: #{squeezed_gru_s_forward.1} parent=81 // pred_check_branch
          %1562 = sbr.rel (%p1560) target = $region106
        $region105: #{squeezed_gru_s_forward.1} parent=81 // pred_region
          %1563 = dma.done [#allocation10], 32
        $region106: #{squeezed_gru_s_forward.1} parent=81 // pred_fallthru
          _
      $region82: #{squeezed_gru_s_forward.1} parent=5 // pred_fallthru
        _
      %p1564 = scmp.le.s32.totalorder 2, %s19
      // Predicated region
      $region107: #{squeezed_gru_s_forward.1} parent=5 // pred_check
        %p1565 = pneg %p1564
      $region108: #{squeezed_gru_s_forward.1} parent=5 // pred_check_branch
        %1567 = sbr.rel (%p1565) target = $region110
      $region109: #{squeezed_gru_s_forward.1} parent=5 // pred_region
        %s1568 = ssub.s32 %s19, 2
        // Predicated region
        $region111: #{squeezed_gru_s_forward.1} parent=109 // pred_check
          %p1569 = pneg %p221
        $region112: #{squeezed_gru_s_forward.1} parent=109 // pred_check_branch
          %1571 = sbr.rel (%p1569) target = $region114
        $region113: #{squeezed_gru_s_forward.1} parent=109 // pred_region
          %s1572 = sand.u32 %s206, 1
          %s1573 = scalar_lea.sflag [#allocation8], %s1572
          %s1574 = sand.u32 %s206, 1
          %s1575 = smul.addr %s1574, 16
          %s1576 = scalar_lea.vmem [#allocation7], %s1575
          %1577 = dma.done %s1573, 256
        $region114: #{squeezed_gru_s_forward.1} parent=109 // pred_fallthru
          _
      $region110: #{squeezed_gru_s_forward.1} parent=5 // pred_fallthru
        _
    $region6: #{squeezed_gru_s_forward.1} parent=1 // loop_footer
      %s23 = sadd.s32 1, %s19
    $region7: #{squeezed_gru_s_forward.1} parent=1 // loop_footer_branch
      %18 = sbr.rel target = $region3
    $region8: #{squeezed_gru_s_forward.1} parent=1 // loop_exit
      _
    %1578 = vsyncpa [#allocation8], 1
    %s1579 = scalar_lea.sflag [#allocation8], 1
    %1580 = vsyncpa %s1579, 1
    %1581 = vsyncpa [#allocation10], 1

</llo_original>
